<compile_context>
chip_gen: v5e
topology: v5e:2x2
jax: 0.10.0
libtpu: 0.0.40
codegen_flags: <defaults>
</compile_context>

<pallas_src>
from functools import partial

import jax
import jax.numpy as jnp
from jax.experimental import pallas as pl
from jax.experimental.pallas import tpu as pltpu

# Module-spec constants (fixed by the PyTorch NetWork definition).
CIN, C1, C2, C3 = 3, 64, 32, 3
KH1 = KW1 = 9
KH3 = KW3 = 5

K1P = 256    # conv1 contraction dim 9*9*3 = 243, zero-padded to a full MXU depth
C1P = 128    # conv1 out-channels 64, zero-padded to a full lane width
C3P = 8      # conv3 out-channels 3, padded to one sublane group (8)


def _srcnn_kernel(x_ref, w1_ref, b1_ref, w2_ref, b2_ref, w3_ref, b3_ref, out_ref,
                  *, B, M1pad, Wo1, M3):
    """Whole forward pass for B images, entirely in VMEM.

    x_ref  : (B, M1pad, K1P)  full 9x9 im2col rows (flat h*Wo1+w), zero-padded
                              rows at the bottom only feed cropped columns.
    w1_ref : (K1P, C1P)       conv1 weights, K = (kh*KW1+kw)*Cin + c, co padded
    w2_ref : (C1P, C2)        1x1 conv2 weights (rows >= 64 are zero)
    w3_ref : (KH3, KW3*C2, C3P) conv3 weights, per-kh K = kw*C2 + c, co padded
    out_ref: (B, C3P, M3)     channel-major conv3 output on the Wo1-wide grid
    """
    # ---- conv1 + ReLU: one big-K dot (batch folded into M) ----
    lhs1 = x_ref[...].reshape(B * M1pad, x_ref.shape[-1])              # (B*M1pad, 256)
    h1 = jnp.dot(lhs1, w1_ref[...], preferred_element_type=jnp.float32)
    h1 = jnp.maximum(h1 + b1_ref[...], 0.0)                            # (B*M1pad, 128)

    # ---- conv2 (1x1) + ReLU ----
    h2 = jnp.dot(h1, w2_ref[...], preferred_element_type=jnp.float32)
    h2 = jnp.maximum(h2 + b2_ref[...], 0.0)                            # (B*M1pad, 32)
    h2 = h2.reshape(B, M1pad, C2)

    # ---- conv3: KW folded into K -> KH3 dots of K = KW3*C2 = 160 ----
    # NOTE(fragility, see review): shifted-slice indexing on the flat h*Wo1+w
    # grid is exact for all *kept* columns because Wo1 - Wo3 == KW3 - 1; rows
    # that read the zero-padded bottom of h2 (or wrap within a row) only feed
    # output columns that the wrapper crops with [..., :Wo3].
    acc3 = jnp.zeros((B * M3, w3_ref.shape[-1]), jnp.float32)
    for kh in range(KH3):
        base = kh * Wo1
        lhs3 = jnp.concatenate(
            [h2[:, base + kw: base + kw + M3, :] for kw in range(KW3)],
            axis=-1).reshape(B * M3, KW3 * C2)                         # (B*M3, 160)
        acc3 = acc3 + jnp.dot(lhs3, w3_ref[kh],
                              preferred_element_type=jnp.float32)
    out3 = acc3 + b3_ref[...]                                          # (B*M3, 8)

    # channel-major store: only 8 sublanes transposed, lane axis = spatial (M3)
    out_ref[...] = jnp.transpose(out3.reshape(B, M3, -1),
                                 (0, 2, 1)).astype(out_ref.dtype)


def init_params(key):
    """Deterministic parameter init (shapes match the PyTorch module)."""
    ks = jax.random.split(key, 6)

    def winit(k, shape):
        fan_in = shape[1] * shape[2] * shape[3]
        return jax.random.normal(k, shape, jnp.float32) / jnp.sqrt(fan_in)

    return {
        "w1": winit(ks[0], (C1, CIN, KH1, KW1)),
        "b1": 0.01 * jax.random.normal(ks[1], (C1,), jnp.float32),
        "w2": winit(ks[2], (C2, C1, 1, 1)),
        "b2": 0.01 * jax.random.normal(ks[3], (C2,), jnp.float32),
        "w3": winit(ks[4], (C3, C2, KH3, KW3)),
        "b3": 0.01 * jax.random.normal(ks[5], (C3,), jnp.float32),
    }


def pack_params(params):
    """One-time packing of weights into MXU-friendly layouts (hoisted out of the
    per-call hot path so the kernel isn't preceded by transposes/pads)."""
    # conv1: (O,I,KH,KW) -> (kh,kw,c,o) -> (243, 64) -> pad to (256, 128)
    w1 = jnp.transpose(params["w1"], (2, 3, 1, 0)).reshape(KH1 * KW1 * CIN, C1)
    w1 = jnp.pad(w1, ((0, K1P - w1.shape[0]), (0, C1P - C1)))
    b1 = jnp.pad(params["b1"], (0, C1P - C1)).reshape(1, C1P)

    # conv2 (1x1): (O,I,1,1) -> (I, O) -> pad rows to 128
    w2 = jnp.pad(params["w2"][:, :, 0, 0].T, ((0, C1P - C1), (0, 0)))
    b2 = params["b2"].reshape(1, C2)

    # conv3: (O,I,KH,KW) -> (kh, kw*C2 + c, o) -> pad out-channels to 8
    w3 = jnp.transpose(params["w3"], (2, 3, 1, 0)).reshape(KH3, KW3 * C2, C3)
    w3 = jnp.pad(w3, ((0, 0), (0, 0), (0, C3P - C3)))
    b3 = jnp.pad(params["b3"], (0, C3P - C3)).reshape(1, C3P)

    return {"w1": w1, "b1": b1, "w2": w2, "b2": b2, "w3": w3, "b3": b3}


@jax.jit
def network_forward(packed, x_nchw):
    N, Cin, H, W = x_nchw.shape
    assert Cin == CIN
    Ho1, Wo1 = H - KH1 + 1, W - KW1 + 1            # conv1 / conv2 spatial
    Ho3, Wo3 = Ho1 - KH3 + 1, Wo1 - KW3 + 1        # conv3 spatial
    M1 = Ho1 * Wo1                                 # real conv1 rows (flat h*Wo1+w)
    M3 = Ho3 * Wo1                                 # conv3 rows (width cropped later)

    # conv3's shifted slices read h2 rows up to (KH3-1)*Wo1 + (KW3-1) + M3 - 1;
    # pad the row count so those reads land on zero rows, rounded to 8 sublanes.
    rows_needed = (KH3 - 1) * Wo1 + (KW3 - 1) + M3
    M1pad = ((max(M1, rows_needed) + 7) // 8) * 8

    # ---- input prep: full 9x9 im2col (cheap: ~270 KB / image in HBM) ----
    x_nhwc = jnp.transpose(x_nchw, (0, 2, 3, 1))                       # (N,H,W,Cin)
    cols = jnp.concatenate(
        [x_nhwc[:, kh:kh + Ho1, kw:kw + Wo1, :]
         for kh in range(KH1) for kw in range(KW1)], axis=-1)          # (N,Ho1,Wo1,243)
    cols = cols.reshape(N, M1, KH1 * KW1 * CIN)
    cols = jnp.pad(cols, ((0, 0), (0, M1pad - M1),
                          (0, K1P - KH1 * KW1 * CIN)))                 # (N,M1pad,256)

    # ---- grid: 2 parallel blocks (both v7x cores busy); batch folded into M ----
    NB = 2 if (N % 2 == 0 and N >= 2) else 1
    B = N // NB

    kernel = partial(_srcnn_kernel, B=B, M1pad=M1pad, Wo1=Wo1, M3=M3)

    out = pl.pallas_call(
        kernel,
        out_shape=jax.ShapeDtypeStruct((N, C3P, M3), jnp.float32),
        grid_spec=pltpu.PrefetchScalarGridSpec(
            num_scalar_prefetch=0,
            grid=(NB,),
            in_specs=[
                pl.BlockSpec((B, M1pad, K1P), lambda i: (i, 0, 0)),
                pl.BlockSpec((K1P, C1P), lambda i: (0, 0)),
                pl.BlockSpec((1, C1P), lambda i: (0, 0)),
                pl.BlockSpec((C1P, C2), lambda i: (0, 0)),
                pl.BlockSpec((1, C2), lambda i: (0, 0)),
                pl.BlockSpec((KH3, KW3 * C2, C3P), lambda i: (0, 0, 0)),
                pl.BlockSpec((1, C3P), lambda i: (0, 0)),
            ],
            out_specs=pl.BlockSpec((B, C3P, M3), lambda i: (i, 0, 0)),
        ),
        compiler_params=pltpu.CompilerParams(
            dimension_semantics=("parallel",)),
    )(cols, packed["w1"], packed["b1"], packed["w2"], packed["b2"],
      packed["w3"], packed["b3"])

    # (N, 8, Ho3*Wo1) -> (N, 8, Ho3, Wo1) -> crop channels + width -> NCHW
    return out.reshape(N, C3P, Ho3, Wo1)[:, :C3, :, :Wo3]


def reference_forward(params, x_nchw):
    """Pure-JAX reference (matches PyTorch NCHW conv semantics)."""
    def conv(x, w, b):
        y = jax.lax.conv_general_dilated(
            x, w, (1, 1), "VALID",
            dimension_numbers=("NCHW", "OIHW", "NCHW"))
        return y + b[None, :, None, None]

    y = jax.nn.relu(conv(x_nchw, params["w1"], params["b1"]))
    y = jax.nn.relu(conv(y, params["w2"], params["b2"]))
    return conv(y, params["w3"], params["b3"])


if __name__ == "__main__":
    key = jax.random.PRNGKey(0)
    pkey, xkey = jax.random.split(key)
    params = init_params(pkey)
    packed = pack_params(params)            # one-time weight packing (off hot path)

    # small NCHW input; 24x24 -> conv1(k9): 16x16 -> conv2(k1): 16x16 -> conv3(k5): 12x12
    x = jax.random.normal(xkey, (2, 3, 24, 24), jnp.float32)

    out = network_forward(packed, x)
    out = jax.block_until_ready(out)
    assert out.shape == (2, 3, 12, 12), out.shape

    ref = jax.block_until_ready(reference_forward(params, x))
    assert jnp.allclose(out, ref, atol=1e-4, rtol=1e-4), float(
        jnp.max(jnp.abs(out - ref)))

    print("KERNEL_OK")
</pallas_src>

<mosaic_0001>
module attributes {stable_mosaic.version = 11 : i64} {
  func.func @_srcnn_kernel(%arg0: i32, %arg1: memref<1x264x256xf32, #tpu.memory_space<vmem>>, %arg2: memref<256x128xf32, #tpu.memory_space<vmem>>, %arg3: memref<1x128xf32, #tpu.memory_space<vmem>>, %arg4: memref<128x32xf32, #tpu.memory_space<vmem>>, %arg5: memref<1x32xf32, #tpu.memory_space<vmem>>, %arg6: memref<5x160x8xf32, #tpu.memory_space<vmem>>, %arg7: memref<1x8xf32, #tpu.memory_space<vmem>>, %arg8: memref<1x8x192xf32, #tpu.memory_space<vmem>>) attributes {dimension_semantics = [#tpu.dimension_semantics<parallel>], iteration_bounds = array<i64: 2>, scalar_prefetch = 0 : i64, scratch_operands = 0 : i64, tpu.core_type = #tpu.core_type<tc>, window_params = [{transform_indices = @transform_0, window_bounds = array<i64: 1, 264, 256>}, {pipeline_mode = #tpu.pipeline_mode<synchronous>, transform_indices = @transform_1, window_bounds = array<i64: 256, 128>}, {pipeline_mode = #tpu.pipeline_mode<synchronous>, transform_indices = @transform_2, window_bounds = array<i64: 1, 128>}, {pipeline_mode = #tpu.pipeline_mode<synchronous>, transform_indices = @transform_3, window_bounds = array<i64: 128, 32>}, {pipeline_mode = #tpu.pipeline_mode<synchronous>, transform_indices = @transform_4, window_bounds = array<i64: 1, 32>}, {pipeline_mode = #tpu.pipeline_mode<synchronous>, transform_indices = @transform_5, window_bounds = array<i64: 5, 160, 8>}, {pipeline_mode = #tpu.pipeline_mode<synchronous>, transform_indices = @transform_6, window_bounds = array<i64: 1, 8>}, {transform_indices = @transform_7, window_bounds = array<i64: 1, 8, 192>}]} {
    %c0 = arith.constant 0 : index
    %c0_0 = arith.constant 0 : index
    %c0_1 = arith.constant 0 : index
    %0 = vector.load %arg1[%c0, %c0_0, %c0_1] : memref<1x264x256xf32, #tpu.memory_space<vmem>>, vector<1x264x256xf32>
    %1 = vector.shape_cast %0 : vector<1x264x256xf32> to vector<264x256xf32>
    %c0_2 = arith.constant 0 : index
    %c0_3 = arith.constant 0 : index
    %2 = vector.load %arg2[%c0_2, %c0_3] : memref<256x128xf32, #tpu.memory_space<vmem>>, vector<256x128xf32>
    %cst = arith.constant dense<0.000000e+00> : vector<264x128xf32>
    %3 = tpu.matmul %1, %2, %cst {dimension_numbers = #tpu.dot_dimension_numbers<[1], [0], [0], [1], [0, 0, 1, 1], [], []>} : vector<264x256xf32>, vector<256x128xf32>, vector<264x128xf32> -> vector<264x128xf32>
    %c0_4 = arith.constant 0 : index
    %c0_5 = arith.constant 0 : index
    %4 = vector.load %arg3[%c0_4, %c0_5] : memref<1x128xf32, #tpu.memory_space<vmem>>, vector<1x128xf32>
    %5 = vector.broadcast %4 : vector<1x128xf32> to vector<264x128xf32>
    %6 = arith.addf %3, %5 : vector<264x128xf32>
    %cst_6 = arith.constant 0.000000e+00 : f32
    %7 = vector.broadcast %cst_6 : f32 to vector<264x128xf32>
    %8 = arith.maximumf %6, %7 : vector<264x128xf32>
    %c0_7 = arith.constant 0 : index
    %c0_8 = arith.constant 0 : index
    %9 = vector.load %arg4[%c0_7, %c0_8] : memref<128x32xf32, #tpu.memory_space<vmem>>, vector<128x32xf32>
    %cst_9 = arith.constant dense<0.000000e+00> : vector<264x32xf32>
    %10 = tpu.matmul %8, %9, %cst_9 {dimension_numbers = #tpu.dot_dimension_numbers<[1], [0], [0], [1], [0, 0, 1, 1], [], []>} : vector<264x128xf32>, vector<128x32xf32>, vector<264x32xf32> -> vector<264x32xf32>
    %c0_10 = arith.constant 0 : index
    %c0_11 = arith.constant 0 : index
    %11 = vector.load %arg5[%c0_10, %c0_11] : memref<1x32xf32, #tpu.memory_space<vmem>>, vector<1x32xf32>
    %12 = vector.broadcast %11 : vector<1x32xf32> to vector<264x32xf32>
    %13 = arith.addf %10, %12 : vector<264x32xf32>
    %cst_12 = arith.constant 0.000000e+00 : f32
    %14 = vector.broadcast %cst_12 : f32 to vector<264x32xf32>
    %15 = arith.maximumf %13, %14 : vector<264x32xf32>
    %16 = vector.shape_cast %15 : vector<264x32xf32> to vector<1x264x32xf32>
    %cst_13 = arith.constant 0.000000e+00 : f32
    %17 = vector.broadcast %cst_13 : f32 to vector<192x8xf32>
    %18 = vector.extract_strided_slice %16 {offsets = [0, 0, 0], sizes = [1, 192, 32], strides = [1, 1, 1]} : vector<1x264x32xf32> to vector<1x192x32xf32>
    %19 = vector.extract_strided_slice %16 {offsets = [0, 1, 0], sizes = [1, 192, 32], strides = [1, 1, 1]} : vector<1x264x32xf32> to vector<1x192x32xf32>
    %20 = vector.extract_strided_slice %16 {offsets = [0, 2, 0], sizes = [1, 192, 32], strides = [1, 1, 1]} : vector<1x264x32xf32> to vector<1x192x32xf32>
    %21 = vector.extract_strided_slice %16 {offsets = [0, 3, 0], sizes = [1, 192, 32], strides = [1, 1, 1]} : vector<1x264x32xf32> to vector<1x192x32xf32>
    %22 = vector.extract_strided_slice %16 {offsets = [0, 4, 0], sizes = [1, 192, 32], strides = [1, 1, 1]} : vector<1x264x32xf32> to vector<1x192x32xf32>
    %23 = tpu.concatenate %18, %19, %20, %21, %22 in 2 : vector<1x192x32xf32>, vector<1x192x32xf32>, vector<1x192x32xf32>, vector<1x192x32xf32>, vector<1x192x32xf32> -> vector<1x192x160xf32>
    %24 = vector.shape_cast %23 : vector<1x192x160xf32> to vector<192x160xf32>
    %c0_14 = arith.constant 0 : index
    %c0_15 = arith.constant 0 : index
    %c0_16 = arith.constant 0 : index
    %25 = vector.load %arg6[%c0_14, %c0_15, %c0_16] : memref<5x160x8xf32, #tpu.memory_space<vmem>>, vector<1x160x8xf32>
    %26 = vector.shape_cast %25 : vector<1x160x8xf32> to vector<160x8xf32>
    %cst_17 = arith.constant dense<0.000000e+00> : vector<192x8xf32>
    %27 = tpu.matmul %24, %26, %cst_17 {dimension_numbers = #tpu.dot_dimension_numbers<[1], [0], [0], [1], [0, 0, 1, 1], [], []>} : vector<192x160xf32>, vector<160x8xf32>, vector<192x8xf32> -> vector<192x8xf32>
    %28 = arith.addf %17, %27 : vector<192x8xf32>
    %29 = vector.extract_strided_slice %16 {offsets = [0, 16, 0], sizes = [1, 192, 32], strides = [1, 1, 1]} : vector<1x264x32xf32> to vector<1x192x32xf32>
    %30 = vector.extract_strided_slice %16 {offsets = [0, 17, 0], sizes = [1, 192, 32], strides = [1, 1, 1]} : vector<1x264x32xf32> to vector<1x192x32xf32>
    %31 = vector.extract_strided_slice %16 {offsets = [0, 18, 0], sizes = [1, 192, 32], strides = [1, 1, 1]} : vector<1x264x32xf32> to vector<1x192x32xf32>
    %32 = vector.extract_strided_slice %16 {offsets = [0, 19, 0], sizes = [1, 192, 32], strides = [1, 1, 1]} : vector<1x264x32xf32> to vector<1x192x32xf32>
    %33 = vector.extract_strided_slice %16 {offsets = [0, 20, 0], sizes = [1, 192, 32], strides = [1, 1, 1]} : vector<1x264x32xf32> to vector<1x192x32xf32>
    %34 = tpu.concatenate %29, %30, %31, %32, %33 in 2 : vector<1x192x32xf32>, vector<1x192x32xf32>, vector<1x192x32xf32>, vector<1x192x32xf32>, vector<1x192x32xf32> -> vector<1x192x160xf32>
    %35 = vector.shape_cast %34 : vector<1x192x160xf32> to vector<192x160xf32>
    %c1 = arith.constant 1 : index
    %c0_18 = arith.constant 0 : index
    %c0_19 = arith.constant 0 : index
    %36 = vector.load %arg6[%c1, %c0_18, %c0_19] : memref<5x160x8xf32, #tpu.memory_space<vmem>>, vector<1x160x8xf32>
    %37 = vector.shape_cast %36 : vector<1x160x8xf32> to vector<160x8xf32>
    %cst_20 = arith.constant dense<0.000000e+00> : vector<192x8xf32>
    %38 = tpu.matmul %35, %37, %cst_20 {dimension_numbers = #tpu.dot_dimension_numbers<[1], [0], [0], [1], [0, 0, 1, 1], [], []>} : vector<192x160xf32>, vector<160x8xf32>, vector<192x8xf32> -> vector<192x8xf32>
    %39 = arith.addf %28, %38 : vector<192x8xf32>
    %40 = vector.extract_strided_slice %16 {offsets = [0, 32, 0], sizes = [1, 192, 32], strides = [1, 1, 1]} : vector<1x264x32xf32> to vector<1x192x32xf32>
    %41 = vector.extract_strided_slice %16 {offsets = [0, 33, 0], sizes = [1, 192, 32], strides = [1, 1, 1]} : vector<1x264x32xf32> to vector<1x192x32xf32>
    %42 = vector.extract_strided_slice %16 {offsets = [0, 34, 0], sizes = [1, 192, 32], strides = [1, 1, 1]} : vector<1x264x32xf32> to vector<1x192x32xf32>
    %43 = vector.extract_strided_slice %16 {offsets = [0, 35, 0], sizes = [1, 192, 32], strides = [1, 1, 1]} : vector<1x264x32xf32> to vector<1x192x32xf32>
    %44 = vector.extract_strided_slice %16 {offsets = [0, 36, 0], sizes = [1, 192, 32], strides = [1, 1, 1]} : vector<1x264x32xf32> to vector<1x192x32xf32>
    %45 = tpu.concatenate %40, %41, %42, %43, %44 in 2 : vector<1x192x32xf32>, vector<1x192x32xf32>, vector<1x192x32xf32>, vector<1x192x32xf32>, vector<1x192x32xf32> -> vector<1x192x160xf32>
    %46 = vector.shape_cast %45 : vector<1x192x160xf32> to vector<192x160xf32>
    %c2 = arith.constant 2 : index
    %c0_21 = arith.constant 0 : index
    %c0_22 = arith.constant 0 : index
    %47 = vector.load %arg6[%c2, %c0_21, %c0_22] : memref<5x160x8xf32, #tpu.memory_space<vmem>>, vector<1x160x8xf32>
    %48 = vector.shape_cast %47 : vector<1x160x8xf32> to vector<160x8xf32>
    %cst_23 = arith.constant dense<0.000000e+00> : vector<192x8xf32>
    %49 = tpu.matmul %46, %48, %cst_23 {dimension_numbers = #tpu.dot_dimension_numbers<[1], [0], [0], [1], [0, 0, 1, 1], [], []>} : vector<192x160xf32>, vector<160x8xf32>, vector<192x8xf32> -> vector<192x8xf32>
    %50 = arith.addf %39, %49 : vector<192x8xf32>
    %51 = vector.extract_strided_slice %16 {offsets = [0, 48, 0], sizes = [1, 192, 32], strides = [1, 1, 1]} : vector<1x264x32xf32> to vector<1x192x32xf32>
    %52 = vector.extract_strided_slice %16 {offsets = [0, 49, 0], sizes = [1, 192, 32], strides = [1, 1, 1]} : vector<1x264x32xf32> to vector<1x192x32xf32>
    %53 = vector.extract_strided_slice %16 {offsets = [0, 50, 0], sizes = [1, 192, 32], strides = [1, 1, 1]} : vector<1x264x32xf32> to vector<1x192x32xf32>
    %54 = vector.extract_strided_slice %16 {offsets = [0, 51, 0], sizes = [1, 192, 32], strides = [1, 1, 1]} : vector<1x264x32xf32> to vector<1x192x32xf32>
    %55 = vector.extract_strided_slice %16 {offsets = [0, 52, 0], sizes = [1, 192, 32], strides = [1, 1, 1]} : vector<1x264x32xf32> to vector<1x192x32xf32>
    %56 = tpu.concatenate %51, %52, %53, %54, %55 in 2 : vector<1x192x32xf32>, vector<1x192x32xf32>, vector<1x192x32xf32>, vector<1x192x32xf32>, vector<1x192x32xf32> -> vector<1x192x160xf32>
    %57 = vector.shape_cast %56 : vector<1x192x160xf32> to vector<192x160xf32>
    %c3 = arith.constant 3 : index
    %c0_24 = arith.constant 0 : index
    %c0_25 = arith.constant 0 : index
    %58 = vector.load %arg6[%c3, %c0_24, %c0_25] : memref<5x160x8xf32, #tpu.memory_space<vmem>>, vector<1x160x8xf32>
    %59 = vector.shape_cast %58 : vector<1x160x8xf32> to vector<160x8xf32>
    %cst_26 = arith.constant dense<0.000000e+00> : vector<192x8xf32>
    %60 = tpu.matmul %57, %59, %cst_26 {dimension_numbers = #tpu.dot_dimension_numbers<[1], [0], [0], [1], [0, 0, 1, 1], [], []>} : vector<192x160xf32>, vector<160x8xf32>, vector<192x8xf32> -> vector<192x8xf32>
    %61 = arith.addf %50, %60 : vector<192x8xf32>
    %62 = vector.extract_strided_slice %16 {offsets = [0, 64, 0], sizes = [1, 192, 32], strides = [1, 1, 1]} : vector<1x264x32xf32> to vector<1x192x32xf32>
    %63 = vector.extract_strided_slice %16 {offsets = [0, 65, 0], sizes = [1, 192, 32], strides = [1, 1, 1]} : vector<1x264x32xf32> to vector<1x192x32xf32>
    %64 = vector.extract_strided_slice %16 {offsets = [0, 66, 0], sizes = [1, 192, 32], strides = [1, 1, 1]} : vector<1x264x32xf32> to vector<1x192x32xf32>
    %65 = vector.extract_strided_slice %16 {offsets = [0, 67, 0], sizes = [1, 192, 32], strides = [1, 1, 1]} : vector<1x264x32xf32> to vector<1x192x32xf32>
    %66 = vector.extract_strided_slice %16 {offsets = [0, 68, 0], sizes = [1, 192, 32], strides = [1, 1, 1]} : vector<1x264x32xf32> to vector<1x192x32xf32>
    %67 = tpu.concatenate %62, %63, %64, %65, %66 in 2 : vector<1x192x32xf32>, vector<1x192x32xf32>, vector<1x192x32xf32>, vector<1x192x32xf32>, vector<1x192x32xf32> -> vector<1x192x160xf32>
    %68 = vector.shape_cast %67 : vector<1x192x160xf32> to vector<192x160xf32>
    %c4 = arith.constant 4 : index
    %c0_27 = arith.constant 0 : index
    %c0_28 = arith.constant 0 : index
    %69 = vector.load %arg6[%c4, %c0_27, %c0_28] : memref<5x160x8xf32, #tpu.memory_space<vmem>>, vector<1x160x8xf32>
    %70 = vector.shape_cast %69 : vector<1x160x8xf32> to vector<160x8xf32>
    %cst_29 = arith.constant dense<0.000000e+00> : vector<192x8xf32>
    %71 = tpu.matmul %68, %70, %cst_29 {dimension_numbers = #tpu.dot_dimension_numbers<[1], [0], [0], [1], [0, 0, 1, 1], [], []>} : vector<192x160xf32>, vector<160x8xf32>, vector<192x8xf32> -> vector<192x8xf32>
    %72 = arith.addf %61, %71 : vector<192x8xf32>
    %c0_30 = arith.constant 0 : index
    %c0_31 = arith.constant 0 : index
    %73 = vector.load %arg7[%c0_30, %c0_31] : memref<1x8xf32, #tpu.memory_space<vmem>>, vector<1x8xf32>
    %74 = vector.broadcast %73 : vector<1x8xf32> to vector<192x8xf32>
    %75 = arith.addf %72, %74 : vector<192x8xf32>
    %76 = vector.shape_cast %75 : vector<192x8xf32> to vector<1x192x8xf32>
    %77 = tpu.transpose %76, [0, 2, 1] : vector<1x192x8xf32> -> vector<1x8x192xf32>
    %c0_32 = arith.constant 0 : index
    %c0_33 = arith.constant 0 : index
    %c0_34 = arith.constant 0 : index
    %78 = vector.load %arg8[%c0_32, %c0_33, %c0_34] : memref<1x8x192xf32, #tpu.memory_space<vmem>>, vector<1x8x192xf32>
    tpu.vector_store %arg8[%c0_32, %c0_33, %c0_34], %77 {strides = array<i32>} : memref<1x8x192xf32, #tpu.memory_space<vmem>>, vector<1x8x192xf32>,
    return
  }
  func.func @transform_0(%arg0: i32) -> (i32, i32, i32) {
    %c0_i32 = arith.constant 0 : i32
    %c0_i32_0 = arith.constant 0 : i32
    %c0_i32_1 = arith.constant 0 : i32
    return %arg0, %c0_i32, %c0_i32_0 : i32, i32, i32
  }
  func.func @transform_1(%arg0: i32) -> (i32, i32) {
    %c0_i32 = arith.constant 0 : i32
    %c0_i32_0 = arith.constant 0 : i32
    %c0_i32_1 = arith.constant 0 : i32
    return %c0_i32, %c0_i32_0 : i32, i32
  }
  func.func @transform_2(%arg0: i32) -> (i32, i32) {
    %c0_i32 = arith.constant 0 : i32
    %c0_i32_0 = arith.constant 0 : i32
    %c0_i32_1 = arith.constant 0 : i32
    return %c0_i32, %c0_i32_0 : i32, i32
  }
  func.func @transform_3(%arg0: i32) -> (i32, i32) {
    %c0_i32 = arith.constant 0 : i32
    %c0_i32_0 = arith.constant 0 : i32
    %c0_i32_1 = arith.constant 0 : i32
    return %c0_i32, %c0_i32_0 : i32, i32
  }
  func.func @transform_4(%arg0: i32) -> (i32, i32) {
    %c0_i32 = arith.constant 0 : i32
    %c0_i32_0 = arith.constant 0 : i32
    %c0_i32_1 = arith.constant 0 : i32
    return %c0_i32, %c0_i32_0 : i32, i32
  }
  func.func @transform_5(%arg0: i32) -> (i32, i32, i32) {
    %c0_i32 = arith.constant 0 : i32
    %c0_i32_0 = arith.constant 0 : i32
    %c0_i32_1 = arith.constant 0 : i32
    %c0_i32_2 = arith.constant 0 : i32
    return %c0_i32, %c0_i32_0, %c0_i32_1 : i32, i32, i32
  }
  func.func @transform_6(%arg0: i32) -> (i32, i32) {
    %c0_i32 = arith.constant 0 : i32
    %c0_i32_0 = arith.constant 0 : i32
    %c0_i32_1 = arith.constant 0 : i32
    return %c0_i32, %c0_i32_0 : i32, i32
  }
  func.func @transform_7(%arg0: i32) -> (i32, i32, i32) {
    %c0_i32 = arith.constant 0 : i32
    %c0_i32_0 = arith.constant 0 : i32
    %c0_i32_1 = arith.constant 0 : i32
    return %arg0, %c0_i32, %c0_i32_0 : i32, i32, i32
  }
}

</mosaic_0001>

<llo_original>
// kernel: network_forward.1
$region0: #{network_forward.1}
  #allocation0 [shape = 'u32[]', space=smem, size = 0x4, offset = 0x4, fixed_abs, tag = 'smem constant byte address 0x4 - core index']
  #allocation1 [shape = 'u32[72,128]{1,0:T(1,128)}', space=vmem, size = 0x9000, scoped, tag = 'internal scratch']
  %s0 = inlined_call_operand.vmem [shape: f32[2,264,256], index: 0, kind: input, shape index: {}]
  %s1 = inlined_call_operand.vmem [shape: f32[256,128], index: 1, kind: input, shape index: {}]
  %s2 = inlined_call_operand.vmem [shape: f32[1,128], index: 2, kind: input, shape index: {}]
  %s3 = inlined_call_operand.vmem [shape: f32[128,32], index: 3, kind: input, shape index: {}]
  %s4 = inlined_call_operand.vmem [shape: f32[1,32], index: 4, kind: input, shape index: {}]
  %s5 = inlined_call_operand.vmem [shape: f32[5,160,8], index: 5, kind: input, shape index: {}]
  %s6 = inlined_call_operand.vmem [shape: f32[1,8], index: 6, kind: input, shape index: {}]
  %s7 = inlined_call_operand.vmem [shape: f32[2,8,192], index: 7, kind: output, shape index: {}]
  %s8 = sld [smem:[#allocation0]]
  $region61: #{network_forward.1} parent=0
    _
  %s10 = ssub.s32 1, %s8
  %s11 = scalar_select 0, %s10, %s8
  loop: start=0, step=1, limit=4
  $region2: #{network_forward.1} parent=0 // loop_pre_header
    _
  $region3: #{network_forward.1} parent=0 // loop_header
    %s13 = sphi 0, %s17
    %p14 = scmp.ge.s32.totalorder %s13, 4
    %s23 = sphi 0, %s25
    %s26 = sphi 0, %s23
    %s27 = sphi 0, %s26
    %s43 = sphi 0, %s27
    %s47 = sphi 0, %s47
    %s49 = sphi 0, %s47
    %s50 = sphi 0, %s49
    %s64 = sphi 0, %s50
    %s68 = sphi 0, %s68
    %s70 = sphi 0, %s68
    %s71 = sphi 0, %s70
    %s85 = sphi 0, %s71
    %s89 = sphi 0, %s89
    %s91 = sphi 0, %s89
    %s92 = sphi 0, %s91
    %s106 = sphi 0, %s92
    %s110 = sphi 0, %s110
    %s112 = sphi 0, %s110
    %s113 = sphi 0, %s112
    %s127 = sphi 0, %s113
    %s131 = sphi 0, %s131
    %s133 = sphi 0, %s131
    %s134 = sphi 0, %s133
    %s148 = sphi 0, %s134
    %s152 = sphi 0, %s152
    %s154 = sphi 0, %s152
    %s155 = sphi 0, %s154
    %s169 = sphi 0, %s155
    %s175 = sphi 0, %s177
    %s178 = sphi 0, %s175
    %s179 = sphi 0, %s178
    %s195 = sphi 0, %s179
  $region4: #{network_forward.1} parent=0 // loop_header_branch
    %16 = sbr.rel (%p14) target = $region8
  $region5: #{network_forward.1} parent=0 // loop_body
    %s18 = ssub.s32 %s13, 1
    %s19 = ssub.s32 %s13, 2
    %s20 = sadd.s32 %s13, 1
    %s21 = ssub.s32 %s13, %s20
    %p22 = scmp.eq.s32.totalorder %s21, 0
    %s24 = sadd.s32 %s23, 1
    %s25 = scalar_select %p22, %s23, %s24
    %p28 = pneg %p22
    %p29 = scmp.eq.s32.totalorder %s13, 1
    %p30 = por %p28, %p29
    %p31 = scmp.ne.s32.totalorder %s23, %s26
    %p32 = scmp.eq.s32.totalorder %s13, 0
    %p33 = por %p31, %p32
    %p34 = scmp.ne.s32.totalorder %s23, %s26
    %p35 = scmp.eq.s32.totalorder %s18, 1
    %p36 = por %p34, %p35
    %p37 = scmp.ne.s32.totalorder %s26, %s27
    %p38 = scmp.eq.s32.totalorder %s18, 0
    %p39 = por %p37, %p38
    %p40 = scmp.ne.s32.totalorder %s26, %s27
    %p41 = scmp.eq.s32.totalorder %s19, 1
    %p42 = por %p40, %p41
    %p44 = scmp.ne.s32.totalorder %s27, %s43
    %p45 = scmp.eq.s32.totalorder %s19, 0
    %p46 = por %p44, %p45
    %s48 = sadd.s32 %s47, 1
    %p51 = scmp.eq.s32.totalorder %s13, 1
    %p52 = scmp.ne.s32.totalorder %s47, %s49
    %p53 = scmp.eq.s32.totalorder %s13, 0
    %p54 = por %p52, %p53
    %p55 = scmp.ne.s32.totalorder %s47, %s49
    %p56 = scmp.eq.s32.totalorder %s18, 1
    %p57 = por %p55, %p56
    %p58 = scmp.ne.s32.totalorder %s49, %s50
    %p59 = scmp.eq.s32.totalorder %s18, 0
    %p60 = por %p58, %p59
    %p61 = scmp.ne.s32.totalorder %s49, %s50
    %p62 = scmp.eq.s32.totalorder %s19, 1
    %p63 = por %p61, %p62
    %p65 = scmp.ne.s32.totalorder %s50, %s64
    %p66 = scmp.eq.s32.totalorder %s19, 0
    %p67 = por %p65, %p66
    %s69 = sadd.s32 %s68, 1
    %p72 = scmp.eq.s32.totalorder %s13, 1
    %p73 = scmp.ne.s32.totalorder %s68, %s70
    %p74 = scmp.eq.s32.totalorder %s13, 0
    %p75 = por %p73, %p74
    %p76 = scmp.ne.s32.totalorder %s68, %s70
    %p77 = scmp.eq.s32.totalorder %s18, 1
    %p78 = por %p76, %p77
    %p79 = scmp.ne.s32.totalorder %s70, %s71
    %p80 = scmp.eq.s32.totalorder %s18, 0
    %p81 = por %p79, %p80
    %p82 = scmp.ne.s32.totalorder %s70, %s71
    %p83 = scmp.eq.s32.totalorder %s19, 1
    %p84 = por %p82, %p83
    %p86 = scmp.ne.s32.totalorder %s71, %s85
    %p87 = scmp.eq.s32.totalorder %s19, 0
    %p88 = por %p86, %p87
    %s90 = sadd.s32 %s89, 1
    %p93 = scmp.eq.s32.totalorder %s13, 1
    %p94 = scmp.ne.s32.totalorder %s89, %s91
    %p95 = scmp.eq.s32.totalorder %s13, 0
    %p96 = por %p94, %p95
    %p97 = scmp.ne.s32.totalorder %s89, %s91
    %p98 = scmp.eq.s32.totalorder %s18, 1
    %p99 = por %p97, %p98
    %p100 = scmp.ne.s32.totalorder %s91, %s92
    %p101 = scmp.eq.s32.totalorder %s18, 0
    %p102 = por %p100, %p101
    %p103 = scmp.ne.s32.totalorder %s91, %s92
    %p104 = scmp.eq.s32.totalorder %s19, 1
    %p105 = por %p103, %p104
    %p107 = scmp.ne.s32.totalorder %s92, %s106
    %p108 = scmp.eq.s32.totalorder %s19, 0
    %p109 = por %p107, %p108
    %s111 = sadd.s32 %s110, 1
    %p114 = scmp.eq.s32.totalorder %s13, 1
    %p115 = scmp.ne.s32.totalorder %s110, %s112
    %p116 = scmp.eq.s32.totalorder %s13, 0
    %p117 = por %p115, %p116
    %p118 = scmp.ne.s32.totalorder %s110, %s112
    %p119 = scmp.eq.s32.totalorder %s18, 1
    %p120 = por %p118, %p119
    %p121 = scmp.ne.s32.totalorder %s112, %s113
    %p122 = scmp.eq.s32.totalorder %s18, 0
    %p123 = por %p121, %p122
    %p124 = scmp.ne.s32.totalorder %s112, %s113
    %p125 = scmp.eq.s32.totalorder %s19, 1
    %p126 = por %p124, %p125
    %p128 = scmp.ne.s32.totalorder %s113, %s127
    %p129 = scmp.eq.s32.totalorder %s19, 0
    %p130 = por %p128, %p129
    %s132 = sadd.s32 %s131, 1
    %p135 = scmp.eq.s32.totalorder %s13, 1
    %p136 = scmp.ne.s32.totalorder %s131, %s133
    %p137 = scmp.eq.s32.totalorder %s13, 0
    %p138 = por %p136, %p137
    %p139 = scmp.ne.s32.totalorder %s131, %s133
    %p140 = scmp.eq.s32.totalorder %s18, 1
    %p141 = por %p139, %p140
    %p142 = scmp.ne.s32.totalorder %s133, %s134
    %p143 = scmp.eq.s32.totalorder %s18, 0
    %p144 = por %p142, %p143
    %p145 = scmp.ne.s32.totalorder %s133, %s134
    %p146 = scmp.eq.s32.totalorder %s19, 1
    %p147 = por %p145, %p146
    %p149 = scmp.ne.s32.totalorder %s134, %s148
    %p150 = scmp.eq.s32.totalorder %s19, 0
    %p151 = por %p149, %p150
    %s153 = sadd.s32 %s152, 1
    %p156 = scmp.eq.s32.totalorder %s13, 1
    %p157 = scmp.ne.s32.totalorder %s152, %s154
    %p158 = scmp.eq.s32.totalorder %s13, 0
    %p159 = por %p157, %p158
    %p160 = scmp.ne.s32.totalorder %s152, %s154
    %p161 = scmp.eq.s32.totalorder %s18, 1
    %p162 = por %p160, %p161
    %p163 = scmp.ne.s32.totalorder %s154, %s155
    %p164 = scmp.eq.s32.totalorder %s18, 0
    %p165 = por %p163, %p164
    %p166 = scmp.ne.s32.totalorder %s154, %s155
    %p167 = scmp.eq.s32.totalorder %s19, 1
    %p168 = por %p166, %p167
    %p170 = scmp.ne.s32.totalorder %s155, %s169
    %p171 = scmp.eq.s32.totalorder %s19, 0
    %p172 = por %p170, %p171
    %s173 = ssub.s32 %s13, %s20
    %p174 = scmp.eq.s32.totalorder %s173, 0
    %s176 = sadd.s32 %s175, 1
    %s177 = scalar_select %p174, %s175, %s176
    %p180 = pneg %p174
    %p181 = scmp.eq.s32.totalorder %s13, 1
    %p182 = por %p180, %p181
    %p183 = scmp.ne.s32.totalorder %s175, %s178
    %p184 = scmp.eq.s32.totalorder %s13, 0
    %p185 = por %p183, %p184
    %p186 = scmp.ne.s32.totalorder %s175, %s178
    %p187 = scmp.eq.s32.totalorder %s18, 1
    %p188 = por %p186, %p187
    %p189 = scmp.ne.s32.totalorder %s178, %s179
    %p190 = scmp.eq.s32.totalorder %s18, 0
    %p191 = por %p189, %p190
    %p192 = scmp.ne.s32.totalorder %s178, %s179
    %p193 = scmp.eq.s32.totalorder %s19, 1
    %p194 = por %p192, %p193
    %p196 = scmp.ne.s32.totalorder %s179, %s195
    %p197 = scmp.eq.s32.totalorder %s19, 0
    %p198 = por %p196, %p197
    %p199 = scmp.le.s32.totalorder 1, %s13
    %p200 = scmp.lt.s32.totalorder %s13, 3
    %p201 = pnand %p199, %p200
    %p202 = pneg %p201
    // Predicated region
    $region9: #{network_forward.1} parent=5 // pred_check
      _
    $region10: #{network_forward.1} parent=5 // pred_check_branch
      %204 = sbr.rel (%p201) target = $region12
    $region11: #{network_forward.1} parent=5 // pred_region
      %s205 = ssub.s32 %s13, 1
      // Predicated region
      $region13: #{network_forward.1} parent=11 // pred_check
        %p206 = pneg %p60
      $region14: #{network_forward.1} parent=11 // pred_check_branch
        %208 = sbr.rel (%p206) target = $region16
      $region15: #{network_forward.1} parent=11 // pred_region
        _
      $region16: #{network_forward.1} parent=11 // pred_fallthru
        _
      // Predicated region
      $region17: #{network_forward.1} parent=11 // pred_check
        %p209 = pneg %p81
      $region18: #{network_forward.1} parent=11 // pred_check_branch
        %211 = sbr.rel (%p209) target = $region20
      $region19: #{network_forward.1} parent=11 // pred_region
        _
      $region20: #{network_forward.1} parent=11 // pred_fallthru
        _
      // Predicated region
      $region21: #{network_forward.1} parent=11 // pred_check
        %p212 = pneg %p102
      $region22: #{network_forward.1} parent=11 // pred_check_branch
        %214 = sbr.rel (%p212) target = $region24
      $region23: #{network_forward.1} parent=11 // pred_region
        _
      $region24: #{network_forward.1} parent=11 // pred_fallthru
        _
      // Predicated region
      $region25: #{network_forward.1} parent=11 // pred_check
        %p215 = pneg %p123
      $region26: #{network_forward.1} parent=11 // pred_check_branch
        %217 = sbr.rel (%p215) target = $region28
      $region27: #{network_forward.1} parent=11 // pred_region
        _
      $region28: #{network_forward.1} parent=11 // pred_fallthru
        _
      // Predicated region
      $region29: #{network_forward.1} parent=11 // pred_check
        %p218 = pneg %p144
      $region30: #{network_forward.1} parent=11 // pred_check_branch
        %220 = sbr.rel (%p218) target = $region32
      $region31: #{network_forward.1} parent=11 // pred_region
        _
      $region32: #{network_forward.1} parent=11 // pred_fallthru
        _
      // Predicated region
      $region33: #{network_forward.1} parent=11 // pred_check
        %p221 = pneg %p165
      $region34: #{network_forward.1} parent=11 // pred_check_branch
        %223 = sbr.rel (%p221) target = $region36
      $region35: #{network_forward.1} parent=11 // pred_region
        _
      $region36: #{network_forward.1} parent=11 // pred_fallthru
        _
    $region12: #{network_forward.1} parent=5 // pred_fallthru
      _
    %p224 = scmp.lt.s32.totalorder %s13, 2
    // Predicated region
    $region37: #{network_forward.1} parent=5 // pred_check
      %p225 = pneg %p224
    $region38: #{network_forward.1} parent=5 // pred_check_branch
      %227 = sbr.rel (%p225) target = $region40
    $region39: #{network_forward.1} parent=5 // pred_region
      // Predicated region
      $region41: #{network_forward.1} parent=39 // pred_check
        %p228 = pneg %p33
      $region42: #{network_forward.1} parent=39 // pred_check_branch
        %230 = sbr.rel (%p228) target = $region44
      $region43: #{network_forward.1} parent=39 // pred_region
        %p231 = scmp.lt.s32.totalorder %s13, 1
        %s232 = scalar_select %p231, %s13, 1
        %s233 = smul.addr %s232, 66
        %s234 = smul.addr %s233, 8
        %s235 = scalar_lea.vmem %s0, %s234
      $region44: #{network_forward.1} parent=39 // pred_fallthru
        _
    $region40: #{network_forward.1} parent=5 // pred_fallthru
      _
    %p236 = scmp.le.s32.totalorder 1, %s13
    %p237 = scmp.lt.s32.totalorder %s13, 3
    %p238 = pnand %p236, %p237
    %p239 = pneg %p238
    // Predicated region
    $region45: #{network_forward.1} parent=5 // pred_check
      _
    $region46: #{network_forward.1} parent=5 // pred_check_branch
      %241 = sbr.rel (%p238) target = $region48
    $region47: #{network_forward.1} parent=5 // pred_region
      %s242 = ssub.s32 %s13, 1
      %p243 = scmp.lt.s32.totalorder %s18, 1
      %s244 = scalar_select %p243, %s18, 1
      %s245 = smul.addr %s244, 66
      %s246 = smul.addr %s245, 8
      %s247 = scalar_lea.vmem %s0, %s246
      %p248 = pneg %p39
      %p249 = pneg %p36
      %p250 = pneg %p60
      %p251 = pneg %p57
      %p252 = pneg %p81
      %p253 = pneg %p78
      %p254 = pneg %p102
      %p255 = pneg %p99
      %p256 = pneg %p123
      %p257 = pneg %p120
      %p258 = pneg %p144
      %p259 = pneg %p141
      %p260 = pneg %p165
      %p261 = pneg %p162
      %p262 = pneg %p191
      %p263 = pneg %p188
      %p264 = scmp.lt.s32.totalorder %s18, 1
      %s265 = scalar_select %p264, %s18, 1
      %s266 = smul.addr %s265, 2
      %s267 = smul.addr %s266, 8
      %s268 = scalar_lea.vmem %s7, %s267
      %p269 = scmp.lt.s32.totalorder %s18, 1
      %s270 = scalar_select %p269, %s18, 1
      %s271 = smul.addr %s270, 66
      %s272 = smul.addr %s271, 8
      %s273 = scalar_lea.vmem %s0, %s272
      %p274 = scmp.lt.s32.totalorder %s18, 1
      %s275 = scalar_select %p274, %s18, 1
      %s276 = smul.addr %s275, 2
      %s277 = smul.addr %s276, 8
      %s278 = scalar_lea.vmem %s7, %s277
      %v279 = vld [vmem:[%s273] sm:$0xff]
      %v280 = vld [vmem:[%s273 + $0x8] sm:$0xff]
      %v281 = vld [vmem:[%s273 + $0x10] sm:$0xff]
      %v282 = vld [vmem:[%s273 + $0x18] sm:$0xff]
      %v283 = vld [vmem:[%s273 + $0x20] sm:$0xff]
      %v284 = vld [vmem:[%s273 + $0x28] sm:$0xff]
      %v285 = vld [vmem:[%s273 + $0x30] sm:$0xff]
      %v286 = vld [vmem:[%s273 + $0x38] sm:$0xff]
      %v287 = vld [vmem:[%s273 + $0x40] sm:$0xff]
      %v288 = vld [vmem:[%s273 + $0x48] sm:$0xff]
      %v289 = vld [vmem:[%s273 + $0x50] sm:$0xff]
      %v290 = vld [vmem:[%s273 + $0x58] sm:$0xff]
      %v291 = vld [vmem:[%s273 + $0x60] sm:$0xff]
      %v292 = vld [vmem:[%s273 + $0x68] sm:$0xff]
      %v293 = vld [vmem:[%s273 + $0x70] sm:$0xff]
      %v294 = vld [vmem:[%s273 + $0x78] sm:$0xff]
      %v295 = vld [vmem:[%s273 + $0x80] sm:$0xff]
      %v296 = vld [vmem:[%s273 + $0x88] sm:$0xff]
      %v297 = vld [vmem:[%s273 + $0x90] sm:$0xff]
      %v298 = vld [vmem:[%s273 + $0x98] sm:$0xff]
      %v299 = vld [vmem:[%s273 + $0xa0] sm:$0xff]
      %v300 = vld [vmem:[%s273 + $0xa8] sm:$0xff]
      %v301 = vld [vmem:[%s273 + $0xb0] sm:$0xff]
      %v302 = vld [vmem:[%s273 + $0xb8] sm:$0xff]
      %v303 = vld [vmem:[%s273 + $0xc0] sm:$0xff]
      %v304 = vld [vmem:[%s273 + $0xc8] sm:$0xff]
      %v305 = vld [vmem:[%s273 + $0xd0] sm:$0xff]
      %v306 = vld [vmem:[%s273 + $0xd8] sm:$0xff]
      %v307 = vld [vmem:[%s273 + $0xe0] sm:$0xff]
      %v308 = vld [vmem:[%s273 + $0xe8] sm:$0xff]
      %v309 = vld [vmem:[%s273 + $0xf0] sm:$0xff]
      %v310 = vld [vmem:[%s273 + $0xf8] sm:$0xff]
      %v311 = vld [vmem:[%s273 + $0x100] sm:$0xff]
      %v312 = vld [vmem:[%s273 + $0x108] sm:$0xff]
      %v313 = vld [vmem:[%s273 + $0x110] sm:$0xff]
      %v314 = vld [vmem:[%s273 + $0x118] sm:$0xff]
      %v315 = vld [vmem:[%s273 + $0x120] sm:$0xff]
      %v316 = vld [vmem:[%s273 + $0x128] sm:$0xff]
      %v317 = vld [vmem:[%s273 + $0x130] sm:$0xff]
      %v318 = vld [vmem:[%s273 + $0x138] sm:$0xff]
      %v319 = vld [vmem:[%s273 + $0x140] sm:$0xff]
      %v320 = vld [vmem:[%s273 + $0x148] sm:$0xff]
      %v321 = vld [vmem:[%s273 + $0x150] sm:$0xff]
      %v322 = vld [vmem:[%s273 + $0x158] sm:$0xff]
      %v323 = vld [vmem:[%s273 + $0x160] sm:$0xff]
      %v324 = vld [vmem:[%s273 + $0x168] sm:$0xff]
      %v325 = vld [vmem:[%s273 + $0x170] sm:$0xff]
      %v326 = vld [vmem:[%s273 + $0x178] sm:$0xff]
      %v327 = vld [vmem:[%s273 + $0x180] sm:$0xff]
      %v328 = vld [vmem:[%s273 + $0x188] sm:$0xff]
      %v329 = vld [vmem:[%s273 + $0x190] sm:$0xff]
      %v330 = vld [vmem:[%s273 + $0x198] sm:$0xff]
      %v331 = vld [vmem:[%s273 + $0x1a0] sm:$0xff]
      %v332 = vld [vmem:[%s273 + $0x1a8] sm:$0xff]
      %v333 = vld [vmem:[%s273 + $0x1b0] sm:$0xff]
      %v334 = vld [vmem:[%s273 + $0x1b8] sm:$0xff]
      %v335 = vld [vmem:[%s273 + $0x1c0] sm:$0xff]
      %v336 = vld [vmem:[%s273 + $0x1c8] sm:$0xff]
      %v337 = vld [vmem:[%s273 + $0x1d0] sm:$0xff]
      %v338 = vld [vmem:[%s273 + $0x1d8] sm:$0xff]
      %v339 = vld [vmem:[%s273 + $0x1e0] sm:$0xff]
      %v340 = vld [vmem:[%s273 + $0x1e8] sm:$0xff]
      %v341 = vld [vmem:[%s273 + $0x1f0] sm:$0xff]
      %v342 = vld [vmem:[%s273 + $0x1f8] sm:$0xff]
      %v343 = vld [vmem:[%s273 + $0x200] sm:$0xff]
      %v344 = vld [vmem:[%s273 + $0x208] sm:$0xff]
      %v345 = vld [vmem:[%s1] sm:$0xff]
      %v346 = vld [vmem:[%s1 + $0x8] sm:$0xff]
      %v347 = vld [vmem:[%s1 + $0x10] sm:$0xff]
      %v348 = vld [vmem:[%s1 + $0x18] sm:$0xff]
      %v349 = vld [vmem:[%s1 + $0x20] sm:$0xff]
      %v350 = vld [vmem:[%s1 + $0x28] sm:$0xff]
      %v351 = vld [vmem:[%s1 + $0x30] sm:$0xff]
      %v352 = vld [vmem:[%s1 + $0x38] sm:$0xff]
      %v353 = vld [vmem:[%s1 + $0x40] sm:$0xff]
      %v354 = vld [vmem:[%s1 + $0x48] sm:$0xff]
      %v355 = vld [vmem:[%s1 + $0x50] sm:$0xff]
      %v356 = vld [vmem:[%s1 + $0x58] sm:$0xff]
      %v357 = vld [vmem:[%s1 + $0x60] sm:$0xff]
      %v358 = vld [vmem:[%s1 + $0x68] sm:$0xff]
      %v359 = vld [vmem:[%s1 + $0x70] sm:$0xff]
      %v360 = vld [vmem:[%s1 + $0x78] sm:$0xff]
      %v361 = vld [vmem:[%s1 + $0x80] sm:$0xff]
      %v362 = vld [vmem:[%s1 + $0x88] sm:$0xff]
      %v363 = vld [vmem:[%s1 + $0x90] sm:$0xff]
      %v364 = vld [vmem:[%s1 + $0x98] sm:$0xff]
      %v365 = vld [vmem:[%s1 + $0xa0] sm:$0xff]
      %v366 = vld [vmem:[%s1 + $0xa8] sm:$0xff]
      %v367 = vld [vmem:[%s1 + $0xb0] sm:$0xff]
      %v368 = vld [vmem:[%s1 + $0xb8] sm:$0xff]
      %v369 = vld [vmem:[%s1 + $0xc0] sm:$0xff]
      %v370 = vld [vmem:[%s1 + $0xc8] sm:$0xff]
      %v371 = vld [vmem:[%s1 + $0xd0] sm:$0xff]
      %v372 = vld [vmem:[%s1 + $0xd8] sm:$0xff]
      %v373 = vld [vmem:[%s1 + $0xe0] sm:$0xff]
      %v374 = vld [vmem:[%s1 + $0xe8] sm:$0xff]
      %v375 = vld [vmem:[%s1 + $0xf0] sm:$0xff]
      %v376 = vld [vmem:[%s1 + $0xf8] sm:$0xff]
      %v377 = vld [vmem:[%s2] sm:$0x1]
      %v379 = vperm.slane %v377, 0
      %381 = vmatpush.msra.mxu0 %v360
      %382 = vmatpush.msra.mxu0 %v359
      %383 = vmatpush.msra.mxu0 %v358
      %384 = vmatpush.msra.mxu0 %v357
      %385 = vmatpush.msra.mxu0 %v356
      %386 = vmatpush.msra.mxu0 %v355
      %387 = vmatpush.msra.mxu0 %v354
      %388 = vmatpush.msra.mxu0 %v353
      %389 = vmatpush.msra.mxu0 %v352
      %390 = vmatpush.msra.mxu0 %v351
      %391 = vmatpush.msra.mxu0 %v350
      %392 = vmatpush.msra.mxu0 %v349
      %393 = vmatpush.msra.mxu0 %v348
      %394 = vmatpush.msra.mxu0 %v347
      %395 = vmatpush.msra.mxu0 %v346
      %396 = vmatpush.msra.mxu0 %v345
      %397 = vmatmul.f32.gmra.mxu0 %v279
      %v398 = vpop.f32.mrf.mxu0
      %v399 = vadd.f32 %v379, %v398
      %400 = vmatmul.f32.gmra.mxu0 %v281
      %v401 = vpop.f32.mrf.mxu0
      %v402 = vadd.f32 %v379, %v401
      %403 = vmatmul.f32.gmra.mxu0 %v283
      %v404 = vpop.f32.mrf.mxu0
      %v405 = vadd.f32 %v379, %v404
      %406 = vmatmul.f32.gmra.mxu0 %v285
      %v407 = vpop.f32.mrf.mxu0
      %v408 = vadd.f32 %v379, %v407
      %409 = vmatmul.f32.gmra.mxu0 %v287
      %v410 = vpop.f32.mrf.mxu0
      %v411 = vadd.f32 %v379, %v410
      %412 = vmatmul.f32.gmra.mxu0 %v289
      %v413 = vpop.f32.mrf.mxu0
      %v414 = vadd.f32 %v379, %v413
      %415 = vmatmul.f32.gmra.mxu0 %v291
      %v416 = vpop.f32.mrf.mxu0
      %v417 = vadd.f32 %v379, %v416
      %418 = vmatmul.f32.gmra.mxu0 %v293
      %v419 = vpop.f32.mrf.mxu0
      %v420 = vadd.f32 %v379, %v419
      %421 = vmatmul.f32.gmra.mxu0 %v295
      %v422 = vpop.f32.mrf.mxu0
      %v423 = vadd.f32 %v379, %v422
      %424 = vmatmul.f32.gmra.mxu0 %v297
      %v425 = vpop.f32.mrf.mxu0
      %v426 = vadd.f32 %v379, %v425
      %427 = vmatmul.f32.gmra.mxu0 %v299
      %v428 = vpop.f32.mrf.mxu0
      %v429 = vadd.f32 %v379, %v428
      %430 = vmatmul.f32.gmra.mxu0 %v301
      %v431 = vpop.f32.mrf.mxu0
      %v432 = vadd.f32 %v379, %v431
      %433 = vmatmul.f32.gmra.mxu0 %v303
      %v434 = vpop.f32.mrf.mxu0
      %v435 = vadd.f32 %v379, %v434
      %436 = vmatmul.f32.gmra.mxu0 %v305
      %v437 = vpop.f32.mrf.mxu0
      %v438 = vadd.f32 %v379, %v437
      %439 = vmatmul.f32.gmra.mxu0 %v307
      %v440 = vpop.f32.mrf.mxu0
      %v441 = vadd.f32 %v379, %v440
      %442 = vmatmul.f32.gmra.mxu0 %v309
      %v443 = vpop.f32.mrf.mxu0
      %v444 = vadd.f32 %v379, %v443
      %445 = vmatmul.f32.gmra.mxu0 %v311
      %v446 = vpop.f32.mrf.mxu0
      %v447 = vadd.f32 %v379, %v446
      %448 = vmatmul.f32.gmra.mxu0 %v313
      %v449 = vpop.f32.mrf.mxu0
      %v450 = vadd.f32 %v379, %v449
      %451 = vmatmul.f32.gmra.mxu0 %v315
      %v452 = vpop.f32.mrf.mxu0
      %v453 = vadd.f32 %v379, %v452
      %454 = vmatmul.f32.gmra.mxu0 %v317
      %v455 = vpop.f32.mrf.mxu0
      %v456 = vadd.f32 %v379, %v455
      %457 = vmatmul.f32.gmra.mxu0 %v319
      %v458 = vpop.f32.mrf.mxu0
      %v459 = vadd.f32 %v379, %v458
      %460 = vmatmul.f32.gmra.mxu0 %v321
      %v461 = vpop.f32.mrf.mxu0
      %v462 = vadd.f32 %v379, %v461
      %463 = vmatmul.f32.gmra.mxu0 %v323
      %v464 = vpop.f32.mrf.mxu0
      %v465 = vadd.f32 %v379, %v464
      %466 = vmatmul.f32.gmra.mxu0 %v325
      %v467 = vpop.f32.mrf.mxu0
      %v468 = vadd.f32 %v379, %v467
      %469 = vmatmul.f32.gmra.mxu0 %v327
      %v470 = vpop.f32.mrf.mxu0
      %v471 = vadd.f32 %v379, %v470
      %472 = vmatmul.f32.gmra.mxu0 %v329
      %v473 = vpop.f32.mrf.mxu0
      %v474 = vadd.f32 %v379, %v473
      %475 = vmatmul.f32.gmra.mxu0 %v331
      %v476 = vpop.f32.mrf.mxu0
      %v477 = vadd.f32 %v379, %v476
      %478 = vmatmul.f32.gmra.mxu0 %v333
      %v479 = vpop.f32.mrf.mxu0
      %v480 = vadd.f32 %v379, %v479
      %481 = vmatmul.f32.gmra.mxu0 %v335
      %v482 = vpop.f32.mrf.mxu0
      %v483 = vadd.f32 %v379, %v482
      %484 = vmatmul.f32.gmra.mxu0 %v337
      %v485 = vpop.f32.mrf.mxu0
      %v486 = vadd.f32 %v379, %v485
      %487 = vmatmul.f32.gmra.mxu0 %v339
      %v488 = vpop.f32.mrf.mxu0
      %v489 = vadd.f32 %v379, %v488
      %490 = vmatmul.f32.gmra.mxu0 %v341
      %v491 = vpop.f32.mrf.mxu0
      %v492 = vadd.f32 %v379, %v491
      %493 = vmatmul.f32.gmra.mxu0 %v343
      %v494 = vpop.f32.mrf.mxu0
      %v495 = vadd.f32 %v379, %v494
      %496 = vdwg.mxu0
      %497 = vmatpush.msra.mxu0 %v376
      %498 = vmatpush.msra.mxu0 %v375
      %499 = vmatpush.msra.mxu0 %v374
      %500 = vmatpush.msra.mxu0 %v373
      %501 = vmatpush.msra.mxu0 %v372
      %502 = vmatpush.msra.mxu0 %v371
      %503 = vmatpush.msra.mxu0 %v370
      %504 = vmatpush.msra.mxu0 %v369
      %505 = vmatpush.msra.mxu0 %v368
      %506 = vmatpush.msra.mxu0 %v367
      %507 = vmatpush.msra.mxu0 %v366
      %508 = vmatpush.msra.mxu0 %v365
      %509 = vmatpush.msra.mxu0 %v364
      %510 = vmatpush.msra.mxu0 %v363
      %511 = vmatpush.msra.mxu0 %v362
      %512 = vmatpush.msra.mxu0 %v361
      %513 = vmatmul.f32.gmra.mxu0 %v280
      %v514 = vpop.f32.mrf.mxu0
      %v515 = vadd.f32 %v399, %v514
      %516 = vmatmul.f32.gmra.mxu0 %v282
      %v517 = vpop.f32.mrf.mxu0
      %v518 = vadd.f32 %v402, %v517
      %519 = vmatmul.f32.gmra.mxu0 %v284
      %v520 = vpop.f32.mrf.mxu0
      %v521 = vadd.f32 %v405, %v520
      %522 = vmatmul.f32.gmra.mxu0 %v286
      %v523 = vpop.f32.mrf.mxu0
      %v524 = vadd.f32 %v408, %v523
      %525 = vmatmul.f32.gmra.mxu0 %v288
      %v526 = vpop.f32.mrf.mxu0
      %v527 = vadd.f32 %v411, %v526
      %528 = vmatmul.f32.gmra.mxu0 %v290
      %v529 = vpop.f32.mrf.mxu0
      %v530 = vadd.f32 %v414, %v529
      %531 = vmatmul.f32.gmra.mxu0 %v292
      %v532 = vpop.f32.mrf.mxu0
      %v533 = vadd.f32 %v417, %v532
      %534 = vmatmul.f32.gmra.mxu0 %v294
      %v535 = vpop.f32.mrf.mxu0
      %v536 = vadd.f32 %v420, %v535
      %537 = vmatmul.f32.gmra.mxu0 %v296
      %v538 = vpop.f32.mrf.mxu0
      %v539 = vadd.f32 %v423, %v538
      %540 = vmatmul.f32.gmra.mxu0 %v298
      %v541 = vpop.f32.mrf.mxu0
      %v542 = vadd.f32 %v426, %v541
      %543 = vmatmul.f32.gmra.mxu0 %v300
      %v544 = vpop.f32.mrf.mxu0
      %v545 = vadd.f32 %v429, %v544
      %546 = vmatmul.f32.gmra.mxu0 %v302
      %v547 = vpop.f32.mrf.mxu0
      %v548 = vadd.f32 %v432, %v547
      %549 = vmatmul.f32.gmra.mxu0 %v304
      %v550 = vpop.f32.mrf.mxu0
      %v551 = vadd.f32 %v435, %v550
      %552 = vmatmul.f32.gmra.mxu0 %v306
      %v553 = vpop.f32.mrf.mxu0
      %v554 = vadd.f32 %v438, %v553
      %555 = vmatmul.f32.gmra.mxu0 %v308
      %v556 = vpop.f32.mrf.mxu0
      %v557 = vadd.f32 %v441, %v556
      %558 = vmatmul.f32.gmra.mxu0 %v310
      %v559 = vpop.f32.mrf.mxu0
      %v560 = vadd.f32 %v444, %v559
      %561 = vmatmul.f32.gmra.mxu0 %v312
      %v562 = vpop.f32.mrf.mxu0
      %v563 = vadd.f32 %v447, %v562
      %564 = vmatmul.f32.gmra.mxu0 %v314
      %v565 = vpop.f32.mrf.mxu0
      %v566 = vadd.f32 %v450, %v565
      %567 = vmatmul.f32.gmra.mxu0 %v316
      %v568 = vpop.f32.mrf.mxu0
      %v569 = vadd.f32 %v453, %v568
      %570 = vmatmul.f32.gmra.mxu0 %v318
      %v571 = vpop.f32.mrf.mxu0
      %v572 = vadd.f32 %v456, %v571
      %573 = vmatmul.f32.gmra.mxu0 %v320
      %v574 = vpop.f32.mrf.mxu0
      %v575 = vadd.f32 %v459, %v574
      %576 = vmatmul.f32.gmra.mxu0 %v322
      %v577 = vpop.f32.mrf.mxu0
      %v578 = vadd.f32 %v462, %v577
      %579 = vmatmul.f32.gmra.mxu0 %v324
      %v580 = vpop.f32.mrf.mxu0
      %v581 = vadd.f32 %v465, %v580
      %582 = vmatmul.f32.gmra.mxu0 %v326
      %v583 = vpop.f32.mrf.mxu0
      %v584 = vadd.f32 %v468, %v583
      %585 = vmatmul.f32.gmra.mxu0 %v328
      %v586 = vpop.f32.mrf.mxu0
      %v587 = vadd.f32 %v471, %v586
      %588 = vmatmul.f32.gmra.mxu0 %v330
      %v589 = vpop.f32.mrf.mxu0
      %v590 = vadd.f32 %v474, %v589
      %591 = vmatmul.f32.gmra.mxu0 %v332
      %v592 = vpop.f32.mrf.mxu0
      %v593 = vadd.f32 %v477, %v592
      %594 = vmatmul.f32.gmra.mxu0 %v334
      %v595 = vpop.f32.mrf.mxu0
      %v596 = vadd.f32 %v480, %v595
      %597 = vmatmul.f32.gmra.mxu0 %v336
      %v598 = vpop.f32.mrf.mxu0
      %v599 = vadd.f32 %v483, %v598
      %600 = vmatmul.f32.gmra.mxu0 %v338
      %v601 = vpop.f32.mrf.mxu0
      %v602 = vadd.f32 %v486, %v601
      %603 = vmatmul.f32.gmra.mxu0 %v340
      %v604 = vpop.f32.mrf.mxu0
      %v605 = vadd.f32 %v489, %v604
      %606 = vmatmul.f32.gmra.mxu0 %v342
      %v607 = vpop.f32.mrf.mxu0
      %v608 = vadd.f32 %v492, %v607
      %609 = vmatmul.f32.gmra.mxu0 %v344
      %v610 = vpop.f32.mrf.mxu0
      %v611 = vadd.f32 %v495, %v610
      %612 = vdwg.mxu0
      %v613 = vmax.f32 %v515, 0.0
      %v614 = vmax.f32 %v518, 0.0
      %v615 = vmax.f32 %v521, 0.0
      %v616 = vmax.f32 %v524, 0.0
      %v617 = vmax.f32 %v527, 0.0
      %v618 = vmax.f32 %v530, 0.0
      %v619 = vmax.f32 %v533, 0.0
      %v620 = vmax.f32 %v536, 0.0
      %v621 = vmax.f32 %v539, 0.0
      %v622 = vmax.f32 %v542, 0.0
      %v623 = vmax.f32 %v545, 0.0
      %v624 = vmax.f32 %v548, 0.0
      %v625 = vmax.f32 %v551, 0.0
      %v626 = vmax.f32 %v554, 0.0
      %v627 = vmax.f32 %v557, 0.0
      %v628 = vmax.f32 %v560, 0.0
      %v629 = vmax.f32 %v563, 0.0
      %v630 = vmax.f32 %v566, 0.0
      %v631 = vmax.f32 %v569, 0.0
      %v632 = vmax.f32 %v572, 0.0
      %v633 = vmax.f32 %v575, 0.0
      %v634 = vmax.f32 %v578, 0.0
      %v635 = vmax.f32 %v581, 0.0
      %v636 = vmax.f32 %v584, 0.0
      %v637 = vmax.f32 %v587, 0.0
      %v638 = vmax.f32 %v590, 0.0
      %v639 = vmax.f32 %v593, 0.0
      %v640 = vmax.f32 %v596, 0.0
      %v641 = vmax.f32 %v599, 0.0
      %v642 = vmax.f32 %v602, 0.0
      %v643 = vmax.f32 %v605, 0.0
      %v644 = vmax.f32 %v608, 0.0
      %v645 = vmax.f32 %v611, 0.0
      %v646 = vld [vmem:[%s3] sm:$0xff]
      %v647 = vld [vmem:[%s3 + $0x8] sm:$0xff]
      %v648 = vld [vmem:[%s3 + $0x10] sm:$0xff]
      %v649 = vld [vmem:[%s3 + $0x18] sm:$0xff]
      %v650 = vld [vmem:[%s3 + $0x20] sm:$0xff]
      %v651 = vld [vmem:[%s3 + $0x28] sm:$0xff]
      %v652 = vld [vmem:[%s3 + $0x30] sm:$0xff]
      %v653 = vld [vmem:[%s3 + $0x38] sm:$0xff]
      %v654 = vld [vmem:[%s3 + $0x40] sm:$0xff]
      %v655 = vld [vmem:[%s3 + $0x48] sm:$0xff]
      %v656 = vld [vmem:[%s3 + $0x50] sm:$0xff]
      %v657 = vld [vmem:[%s3 + $0x58] sm:$0xff]
      %v658 = vld [vmem:[%s3 + $0x60] sm:$0xff]
      %v659 = vld [vmem:[%s3 + $0x68] sm:$0xff]
      %v660 = vld [vmem:[%s3 + $0x70] sm:$0xff]
      %v661 = vld [vmem:[%s3 + $0x78] sm:$0xff]
      %v662 = vld [vmem:[%s4] sm:$0x1]
      %v664 = vperm.slane %v662, 0
      %666 = vmatpush.msra.mxu0 %v661
      %667 = vmatpush.msra.mxu0 %v660
      %668 = vmatpush.msra.mxu0 %v659
      %669 = vmatpush.msra.mxu0 %v658
      %670 = vmatpush.msra.mxu0 %v657
      %671 = vmatpush.msra.mxu0 %v656
      %672 = vmatpush.msra.mxu0 %v655
      %673 = vmatpush.msra.mxu0 %v654
      %674 = vmatpush.msra.mxu0 %v653
      %675 = vmatpush.msra.mxu0 %v652
      %676 = vmatpush.msra.mxu0 %v651
      %677 = vmatpush.msra.mxu0 %v650
      %678 = vmatpush.msra.mxu0 %v649
      %679 = vmatpush.msra.mxu0 %v648
      %680 = vmatpush.msra.mxu0 %v647
      %681 = vmatpush.msra.mxu0 %v646
      %682 = vmatmul.f32.gmra.mxu0 %v613
      %v683 = vpop.f32.mrf.mxu0
      %v684 = vadd.f32 %v664, %v683
      %685 = vmatmul.f32.gmra.mxu0 %v614
      %v686 = vpop.f32.mrf.mxu0
      %v687 = vadd.f32 %v664, %v686
      %688 = vmatmul.f32.gmra.mxu0 %v615
      %v689 = vpop.f32.mrf.mxu0
      %v690 = vadd.f32 %v664, %v689
      %691 = vmatmul.f32.gmra.mxu0 %v616
      %v692 = vpop.f32.mrf.mxu0
      %v693 = vadd.f32 %v664, %v692
      %694 = vmatmul.f32.gmra.mxu0 %v617
      %v695 = vpop.f32.mrf.mxu0
      %v696 = vadd.f32 %v664, %v695
      %697 = vmatmul.f32.gmra.mxu0 %v618
      %v698 = vpop.f32.mrf.mxu0
      %v699 = vadd.f32 %v664, %v698
      %700 = vmatmul.f32.gmra.mxu0 %v619
      %v701 = vpop.f32.mrf.mxu0
      %v702 = vadd.f32 %v664, %v701
      %703 = vmatmul.f32.gmra.mxu0 %v620
      %v704 = vpop.f32.mrf.mxu0
      %v705 = vadd.f32 %v664, %v704
      %706 = vmatmul.f32.gmra.mxu0 %v621
      %v707 = vpop.f32.mrf.mxu0
      %v708 = vadd.f32 %v664, %v707
      %709 = vmatmul.f32.gmra.mxu0 %v622
      %v710 = vpop.f32.mrf.mxu0
      %v711 = vadd.f32 %v664, %v710
      %712 = vmatmul.f32.gmra.mxu0 %v623
      %v713 = vpop.f32.mrf.mxu0
      %v714 = vadd.f32 %v664, %v713
      %715 = vmatmul.f32.gmra.mxu0 %v624
      %v716 = vpop.f32.mrf.mxu0
      %v717 = vadd.f32 %v664, %v716
      %718 = vmatmul.f32.gmra.mxu0 %v625
      %v719 = vpop.f32.mrf.mxu0
      %v720 = vadd.f32 %v664, %v719
      %721 = vmatmul.f32.gmra.mxu0 %v626
      %v722 = vpop.f32.mrf.mxu0
      %v723 = vadd.f32 %v664, %v722
      %724 = vmatmul.f32.gmra.mxu0 %v627
      %v725 = vpop.f32.mrf.mxu0
      %v726 = vadd.f32 %v664, %v725
      %727 = vmatmul.f32.gmra.mxu0 %v628
      %v728 = vpop.f32.mrf.mxu0
      %v729 = vadd.f32 %v664, %v728
      %730 = vmatmul.f32.gmra.mxu0 %v629
      %v731 = vpop.f32.mrf.mxu0
      %v732 = vadd.f32 %v664, %v731
      %733 = vmatmul.f32.gmra.mxu0 %v630
      %v734 = vpop.f32.mrf.mxu0
      %v735 = vadd.f32 %v664, %v734
      %736 = vmatmul.f32.gmra.mxu0 %v631
      %v737 = vpop.f32.mrf.mxu0
      %v738 = vadd.f32 %v664, %v737
      %739 = vmatmul.f32.gmra.mxu0 %v632
      %v740 = vpop.f32.mrf.mxu0
      %v741 = vadd.f32 %v664, %v740
      %742 = vmatmul.f32.gmra.mxu0 %v633
      %v743 = vpop.f32.mrf.mxu0
      %v744 = vadd.f32 %v664, %v743
      %745 = vmatmul.f32.gmra.mxu0 %v634
      %v746 = vpop.f32.mrf.mxu0
      %v747 = vadd.f32 %v664, %v746
      %748 = vmatmul.f32.gmra.mxu0 %v635
      %v749 = vpop.f32.mrf.mxu0
      %v750 = vadd.f32 %v664, %v749
      %751 = vmatmul.f32.gmra.mxu0 %v636
      %v752 = vpop.f32.mrf.mxu0
      %v753 = vadd.f32 %v664, %v752
      %754 = vmatmul.f32.gmra.mxu0 %v637
      %v755 = vpop.f32.mrf.mxu0
      %v756 = vadd.f32 %v664, %v755
      %757 = vmatmul.f32.gmra.mxu0 %v638
      %v758 = vpop.f32.mrf.mxu0
      %v759 = vadd.f32 %v664, %v758
      %760 = vmatmul.f32.gmra.mxu0 %v639
      %v761 = vpop.f32.mrf.mxu0
      %v762 = vadd.f32 %v664, %v761
      %763 = vmatmul.f32.gmra.mxu0 %v640
      %v764 = vpop.f32.mrf.mxu0
      %v765 = vadd.f32 %v664, %v764
      %766 = vmatmul.f32.gmra.mxu0 %v641
      %v767 = vpop.f32.mrf.mxu0
      %v768 = vadd.f32 %v664, %v767
      %769 = vmatmul.f32.gmra.mxu0 %v642
      %v770 = vpop.f32.mrf.mxu0
      %v771 = vadd.f32 %v664, %v770
      %772 = vmatmul.f32.gmra.mxu0 %v643
      %v773 = vpop.f32.mrf.mxu0
      %v774 = vadd.f32 %v664, %v773
      %775 = vmatmul.f32.gmra.mxu0 %v644
      %v776 = vpop.f32.mrf.mxu0
      %v777 = vadd.f32 %v664, %v776
      %778 = vmatmul.f32.gmra.mxu0 %v645
      %v779 = vpop.f32.mrf.mxu0
      %v780 = vadd.f32 %v664, %v779
      %781 = vdwg.mxu0
      %v782 = vmax.f32 %v684, 0.0
      %v783 = vmax.f32 %v687, 0.0
      %v784 = vmax.f32 %v690, 0.0
      %v785 = vmax.f32 %v693, 0.0
      %v786 = vmax.f32 %v696, 0.0
      %v787 = vmax.f32 %v699, 0.0
      %v788 = vmax.f32 %v702, 0.0
      %v789 = vmax.f32 %v705, 0.0
      %v790 = vmax.f32 %v708, 0.0
      %v791 = vmax.f32 %v711, 0.0
      %v792 = vmax.f32 %v714, 0.0
      %v793 = vmax.f32 %v717, 0.0
      %v794 = vmax.f32 %v720, 0.0
      %v795 = vmax.f32 %v723, 0.0
      %v796 = vmax.f32 %v726, 0.0
      %v797 = vmax.f32 %v729, 0.0
      %v798 = vmax.f32 %v732, 0.0
      %v799 = vmax.f32 %v735, 0.0
      %v800 = vmax.f32 %v738, 0.0
      %v801 = vmax.f32 %v741, 0.0
      %v802 = vmax.f32 %v744, 0.0
      %v803 = vmax.f32 %v747, 0.0
      %v804 = vmax.f32 %v750, 0.0
      %v805 = vmax.f32 %v753, 0.0
      %v806 = vmax.f32 %v756, 0.0
      %v807 = vmax.f32 %v759, 0.0
      %v808 = vmax.f32 %v762, 0.0
      %v809 = vmax.f32 %v765, 0.0
      %v810 = vmax.f32 %v768, 0.0
      %v811 = vmax.f32 %v771, 0.0
      %v812 = vmax.f32 %v774, 0.0
      %v813 = vmax.f32 %v777, 0.0
      %v814 = vmax.f32 %v780, 0.0
      %vm840 = vcmask 1046528
      %v841 = vrot.slane %v782, 1
      %v842 = vrot.slane %v783, 1
      %v843 = vsel %vm840, %v841, %v842
      %v844 = vrot.slane %v784, 1
      %v845 = vsel %vm840, %v842, %v844
      %v846 = vrot.slane %v785, 1
      %v847 = vsel %vm840, %v844, %v846
      %v848 = vrot.slane %v786, 1
      %v849 = vsel %vm840, %v846, %v848
      %v850 = vrot.slane %v787, 1
      %v851 = vsel %vm840, %v848, %v850
      %v852 = vrot.slane %v788, 1
      %v853 = vsel %vm840, %v850, %v852
      %v854 = vrot.slane %v789, 1
      %v855 = vsel %vm840, %v852, %v854
      %v856 = vrot.slane %v790, 1
      %v857 = vsel %vm840, %v854, %v856
      %v858 = vrot.slane %v791, 1
      %v859 = vsel %vm840, %v856, %v858
      %v860 = vrot.slane %v792, 1
      %v861 = vsel %vm840, %v858, %v860
      %v862 = vrot.slane %v793, 1
      %v863 = vsel %vm840, %v860, %v862
      %v864 = vrot.slane %v794, 1
      %v865 = vsel %vm840, %v862, %v864
      %v866 = vrot.slane %v795, 1
      %v867 = vsel %vm840, %v864, %v866
      %v868 = vrot.slane %v796, 1
      %v869 = vsel %vm840, %v866, %v868
      %v870 = vrot.slane %v797, 1
      %v871 = vsel %vm840, %v868, %v870
      %v872 = vrot.slane %v798, 1
      %v873 = vsel %vm840, %v870, %v872
      %v874 = vrot.slane %v799, 1
      %v875 = vsel %vm840, %v872, %v874
      %v876 = vrot.slane %v800, 1
      %v877 = vsel %vm840, %v874, %v876
      %v878 = vrot.slane %v801, 1
      %v879 = vsel %vm840, %v876, %v878
      %v880 = vrot.slane %v802, 1
      %v881 = vsel %vm840, %v878, %v880
      %v882 = vrot.slane %v803, 1
      %v883 = vsel %vm840, %v880, %v882
      %v884 = vrot.slane %v804, 1
      %v885 = vsel %vm840, %v882, %v884
      %v886 = vrot.slane %v805, 1
      %v887 = vsel %vm840, %v884, %v886
      %v888 = vrot.slane %v806, 1
      %v889 = vsel %vm840, %v886, %v888
      %890 = vrot.lane.b32.xlu0 %v843, 32
      %v891 = vpop.permute.xlu0 %890
      %892 = vrot.lane.b32.xlu0 %v845, 32
      %v893 = vpop.permute.xlu0 %892
      %894 = vrot.lane.b32.xlu0 %v847, 32
      %v895 = vpop.permute.xlu0 %894
      %896 = vrot.lane.b32.xlu0 %v849, 32
      %v897 = vpop.permute.xlu0 %896
      %898 = vrot.lane.b32.xlu0 %v851, 32
      %v899 = vpop.permute.xlu0 %898
      %900 = vrot.lane.b32.xlu0 %v853, 32
      %v901 = vpop.permute.xlu0 %900
      %902 = vrot.lane.b32.xlu0 %v855, 32
      %v903 = vpop.permute.xlu0 %902
      %904 = vrot.lane.b32.xlu0 %v857, 32
      %v905 = vpop.permute.xlu0 %904
      %906 = vrot.lane.b32.xlu0 %v859, 32
      %v907 = vpop.permute.xlu0 %906
      %908 = vrot.lane.b32.xlu0 %v861, 32
      %v909 = vpop.permute.xlu0 %908
      %910 = vrot.lane.b32.xlu0 %v863, 32
      %v911 = vpop.permute.xlu0 %910
      %912 = vrot.lane.b32.xlu0 %v865, 32
      %v913 = vpop.permute.xlu0 %912
      %914 = vrot.lane.b32.xlu0 %v867, 32
      %v915 = vpop.permute.xlu0 %914
      %916 = vrot.lane.b32.xlu0 %v869, 32
      %v917 = vpop.permute.xlu0 %916
      %918 = vrot.lane.b32.xlu0 %v871, 32
      %v919 = vpop.permute.xlu0 %918
      %920 = vrot.lane.b32.xlu0 %v873, 32
      %v921 = vpop.permute.xlu0 %920
      %922 = vrot.lane.b32.xlu0 %v875, 32
      %v923 = vpop.permute.xlu0 %922
      %924 = vrot.lane.b32.xlu0 %v877, 32
      %v925 = vpop.permute.xlu0 %924
      %926 = vrot.lane.b32.xlu0 %v879, 32
      %v927 = vpop.permute.xlu0 %926
      %928 = vrot.lane.b32.xlu0 %v881, 32
      %v929 = vpop.permute.xlu0 %928
      %930 = vrot.lane.b32.xlu0 %v883, 32
      %v931 = vpop.permute.xlu0 %930
      %932 = vrot.lane.b32.xlu0 %v885, 32
      %v933 = vpop.permute.xlu0 %932
      %934 = vrot.lane.b32.xlu0 %v887, 32
      %v935 = vpop.permute.xlu0 %934
      %936 = vrot.lane.b32.xlu0 %v889, 32
      %v937 = vpop.permute.xlu0 %936
      %vm962 = vcmask 1045504
      %v963 = vrot.slane %v782, 2
      %v964 = vrot.slane %v783, 2
      %v965 = vsel %vm962, %v963, %v964
      %v966 = vrot.slane %v784, 2
      %v967 = vsel %vm962, %v964, %v966
      %v968 = vrot.slane %v785, 2
      %v969 = vsel %vm962, %v966, %v968
      %v970 = vrot.slane %v786, 2
      %v971 = vsel %vm962, %v968, %v970
      %v972 = vrot.slane %v787, 2
      %v973 = vsel %vm962, %v970, %v972
      %v974 = vrot.slane %v788, 2
      %v975 = vsel %vm962, %v972, %v974
      %v976 = vrot.slane %v789, 2
      %v977 = vsel %vm962, %v974, %v976
      %v978 = vrot.slane %v790, 2
      %v979 = vsel %vm962, %v976, %v978
      %v980 = vrot.slane %v791, 2
      %v981 = vsel %vm962, %v978, %v980
      %v982 = vrot.slane %v792, 2
      %v983 = vsel %vm962, %v980, %v982
      %v984 = vrot.slane %v793, 2
      %v985 = vsel %vm962, %v982, %v984
      %v986 = vrot.slane %v794, 2
      %v987 = vsel %vm962, %v984, %v986
      %v988 = vrot.slane %v795, 2
      %v989 = vsel %vm962, %v986, %v988
      %v990 = vrot.slane %v796, 2
      %v991 = vsel %vm962, %v988, %v990
      %v992 = vrot.slane %v797, 2
      %v993 = vsel %vm962, %v990, %v992
      %v994 = vrot.slane %v798, 2
      %v995 = vsel %vm962, %v992, %v994
      %v996 = vrot.slane %v799, 2
      %v997 = vsel %vm962, %v994, %v996
      %v998 = vrot.slane %v800, 2
      %v999 = vsel %vm962, %v996, %v998
      %v1000 = vrot.slane %v801, 2
      %v1001 = vsel %vm962, %v998, %v1000
      %v1002 = vrot.slane %v802, 2
      %v1003 = vsel %vm962, %v1000, %v1002
      %v1004 = vrot.slane %v803, 2
      %v1005 = vsel %vm962, %v1002, %v1004
      %v1006 = vrot.slane %v804, 2
      %v1007 = vsel %vm962, %v1004, %v1006
      %v1008 = vrot.slane %v805, 2
      %v1009 = vsel %vm962, %v1006, %v1008
      %v1010 = vrot.slane %v806, 2
      %v1011 = vsel %vm962, %v1008, %v1010
      %1012 = vrot.lane.b32.xlu0 %v965, 64
      %v1013 = vpop.permute.xlu0 %1012
      %1014 = vrot.lane.b32.xlu0 %v967, 64
      %v1015 = vpop.permute.xlu0 %1014
      %1016 = vrot.lane.b32.xlu0 %v969, 64
      %v1017 = vpop.permute.xlu0 %1016
      %1018 = vrot.lane.b32.xlu0 %v971, 64
      %v1019 = vpop.permute.xlu0 %1018
      %1020 = vrot.lane.b32.xlu0 %v973, 64
      %v1021 = vpop.permute.xlu0 %1020
      %1022 = vrot.lane.b32.xlu0 %v975, 64
      %v1023 = vpop.permute.xlu0 %1022
      %1024 = vrot.lane.b32.xlu0 %v977, 64
      %v1025 = vpop.permute.xlu0 %1024
      %1026 = vrot.lane.b32.xlu0 %v979, 64
      %v1027 = vpop.permute.xlu0 %1026
      %1028 = vrot.lane.b32.xlu0 %v981, 64
      %v1029 = vpop.permute.xlu0 %1028
      %1030 = vrot.lane.b32.xlu0 %v983, 64
      %v1031 = vpop.permute.xlu0 %1030
      %1032 = vrot.lane.b32.xlu0 %v985, 64
      %v1033 = vpop.permute.xlu0 %1032
      %1034 = vrot.lane.b32.xlu0 %v987, 64
      %v1035 = vpop.permute.xlu0 %1034
      %1036 = vrot.lane.b32.xlu0 %v989, 64
      %v1037 = vpop.permute.xlu0 %1036
      %1038 = vrot.lane.b32.xlu0 %v991, 64
      %v1039 = vpop.permute.xlu0 %1038
      %1040 = vrot.lane.b32.xlu0 %v993, 64
      %v1041 = vpop.permute.xlu0 %1040
      %1042 = vrot.lane.b32.xlu0 %v995, 64
      %v1043 = vpop.permute.xlu0 %1042
      %1044 = vrot.lane.b32.xlu0 %v997, 64
      %v1045 = vpop.permute.xlu0 %1044
      %1046 = vrot.lane.b32.xlu0 %v999, 64
      %v1047 = vpop.permute.xlu0 %1046
      %1048 = vrot.lane.b32.xlu0 %v1001, 64
      %v1049 = vpop.permute.xlu0 %1048
      %1050 = vrot.lane.b32.xlu0 %v1003, 64
      %v1051 = vpop.permute.xlu0 %1050
      %1052 = vrot.lane.b32.xlu0 %v1005, 64
      %v1053 = vpop.permute.xlu0 %1052
      %1054 = vrot.lane.b32.xlu0 %v1007, 64
      %v1055 = vpop.permute.xlu0 %1054
      %1056 = vrot.lane.b32.xlu0 %v1009, 64
      %v1057 = vpop.permute.xlu0 %1056
      %1058 = vrot.lane.b32.xlu0 %v1011, 64
      %v1059 = vpop.permute.xlu0 %1058
      %vm1084 = vcmask 1044480
      %v1085 = vrot.slane %v782, 3
      %v1086 = vrot.slane %v783, 3
      %v1087 = vsel %vm1084, %v1085, %v1086
      %v1088 = vrot.slane %v784, 3
      %v1089 = vsel %vm1084, %v1086, %v1088
      %v1090 = vrot.slane %v785, 3
      %v1091 = vsel %vm1084, %v1088, %v1090
      %v1092 = vrot.slane %v786, 3
      %v1093 = vsel %vm1084, %v1090, %v1092
      %v1094 = vrot.slane %v787, 3
      %v1095 = vsel %vm1084, %v1092, %v1094
      %v1096 = vrot.slane %v788, 3
      %v1097 = vsel %vm1084, %v1094, %v1096
      %v1098 = vrot.slane %v789, 3
      %v1099 = vsel %vm1084, %v1096, %v1098
      %v1100 = vrot.slane %v790, 3
      %v1101 = vsel %vm1084, %v1098, %v1100
      %v1102 = vrot.slane %v791, 3
      %v1103 = vsel %vm1084, %v1100, %v1102
      %v1104 = vrot.slane %v792, 3
      %v1105 = vsel %vm1084, %v1102, %v1104
      %v1106 = vrot.slane %v793, 3
      %v1107 = vsel %vm1084, %v1104, %v1106
      %v1108 = vrot.slane %v794, 3
      %v1109 = vsel %vm1084, %v1106, %v1108
      %v1110 = vrot.slane %v795, 3
      %v1111 = vsel %vm1084, %v1108, %v1110
      %v1112 = vrot.slane %v796, 3
      %v1113 = vsel %vm1084, %v1110, %v1112
      %v1114 = vrot.slane %v797, 3
      %v1115 = vsel %vm1084, %v1112, %v1114
      %v1116 = vrot.slane %v798, 3
      %v1117 = vsel %vm1084, %v1114, %v1116
      %v1118 = vrot.slane %v799, 3
      %v1119 = vsel %vm1084, %v1116, %v1118
      %v1120 = vrot.slane %v800, 3
      %v1121 = vsel %vm1084, %v1118, %v1120
      %v1122 = vrot.slane %v801, 3
      %v1123 = vsel %vm1084, %v1120, %v1122
      %v1124 = vrot.slane %v802, 3
      %v1125 = vsel %vm1084, %v1122, %v1124
      %v1126 = vrot.slane %v803, 3
      %v1127 = vsel %vm1084, %v1124, %v1126
      %v1128 = vrot.slane %v804, 3
      %v1129 = vsel %vm1084, %v1126, %v1128
      %v1130 = vrot.slane %v805, 3
      %v1131 = vsel %vm1084, %v1128, %v1130
      %v1132 = vrot.slane %v806, 3
      %v1133 = vsel %vm1084, %v1130, %v1132
      %1134 = vrot.lane.b32.xlu0 %v1087, 96
      %v1135 = vpop.permute.xlu0 %1134
      %1136 = vrot.lane.b32.xlu0 %v1089, 96
      %v1137 = vpop.permute.xlu0 %1136
      %1138 = vrot.lane.b32.xlu0 %v1091, 96
      %v1139 = vpop.permute.xlu0 %1138
      %1140 = vrot.lane.b32.xlu0 %v1093, 96
      %v1141 = vpop.permute.xlu0 %1140
      %1142 = vrot.lane.b32.xlu0 %v1095, 96
      %v1143 = vpop.permute.xlu0 %1142
      %1144 = vrot.lane.b32.xlu0 %v1097, 96
      %v1145 = vpop.permute.xlu0 %1144
      %1146 = vrot.lane.b32.xlu0 %v1099, 96
      %v1147 = vpop.permute.xlu0 %1146
      %1148 = vrot.lane.b32.xlu0 %v1101, 96
      %v1149 = vpop.permute.xlu0 %1148
      %1150 = vrot.lane.b32.xlu0 %v1103, 96
      %v1151 = vpop.permute.xlu0 %1150
      %1152 = vrot.lane.b32.xlu0 %v1105, 96
      %v1153 = vpop.permute.xlu0 %1152
      %1154 = vrot.lane.b32.xlu0 %v1107, 96
      %v1155 = vpop.permute.xlu0 %1154
      %1156 = vrot.lane.b32.xlu0 %v1109, 96
      %v1157 = vpop.permute.xlu0 %1156
      %1158 = vrot.lane.b32.xlu0 %v1111, 96
      %v1159 = vpop.permute.xlu0 %1158
      %1160 = vrot.lane.b32.xlu0 %v1113, 96
      %v1161 = vpop.permute.xlu0 %1160
      %1162 = vrot.lane.b32.xlu0 %v1115, 96
      %v1163 = vpop.permute.xlu0 %1162
      %1164 = vrot.lane.b32.xlu0 %v1117, 96
      %v1165 = vpop.permute.xlu0 %1164
      %1166 = vrot.lane.b32.xlu0 %v1119, 96
      %v1167 = vpop.permute.xlu0 %1166
      %1168 = vrot.lane.b32.xlu0 %v1121, 96
      %v1169 = vpop.permute.xlu0 %1168
      %1170 = vrot.lane.b32.xlu0 %v1123, 96
      %v1171 = vpop.permute.xlu0 %1170
      %1172 = vrot.lane.b32.xlu0 %v1125, 96
      %v1173 = vpop.permute.xlu0 %1172
      %1174 = vrot.lane.b32.xlu0 %v1127, 96
      %v1175 = vpop.permute.xlu0 %1174
      %1176 = vrot.lane.b32.xlu0 %v1129, 96
      %v1177 = vpop.permute.xlu0 %1176
      %1178 = vrot.lane.b32.xlu0 %v1131, 96
      %v1179 = vpop.permute.xlu0 %1178
      %1180 = vrot.lane.b32.xlu0 %v1133, 96
      %v1181 = vpop.permute.xlu0 %1180
      %vm1206 = vcmask 1043456
      %v1207 = vrot.slane %v782, 4
      %v1208 = vrot.slane %v783, 4
      %v1209 = vsel %vm1206, %v1207, %v1208
      %v1210 = vrot.slane %v784, 4
      %v1211 = vsel %vm1206, %v1208, %v1210
      %v1212 = vrot.slane %v785, 4
      %v1213 = vsel %vm1206, %v1210, %v1212
      %v1214 = vrot.slane %v786, 4
      %v1215 = vsel %vm1206, %v1212, %v1214
      %v1216 = vrot.slane %v787, 4
      %v1217 = vsel %vm1206, %v1214, %v1216
      %v1218 = vrot.slane %v788, 4
      %v1219 = vsel %vm1206, %v1216, %v1218
      %v1220 = vrot.slane %v789, 4
      %v1221 = vsel %vm1206, %v1218, %v1220
      %v1222 = vrot.slane %v790, 4
      %v1223 = vsel %vm1206, %v1220, %v1222
      %v1224 = vrot.slane %v791, 4
      %v1225 = vsel %vm1206, %v1222, %v1224
      %v1226 = vrot.slane %v792, 4
      %v1227 = vsel %vm1206, %v1224, %v1226
      %v1228 = vrot.slane %v793, 4
      %v1229 = vsel %vm1206, %v1226, %v1228
      %v1230 = vrot.slane %v794, 4
      %v1231 = vsel %vm1206, %v1228, %v1230
      %v1232 = vrot.slane %v795, 4
      %v1233 = vsel %vm1206, %v1230, %v1232
      %v1234 = vrot.slane %v796, 4
      %v1235 = vsel %vm1206, %v1232, %v1234
      %v1236 = vrot.slane %v797, 4
      %v1237 = vsel %vm1206, %v1234, %v1236
      %v1238 = vrot.slane %v798, 4
      %v1239 = vsel %vm1206, %v1236, %v1238
      %v1240 = vrot.slane %v799, 4
      %v1241 = vsel %vm1206, %v1238, %v1240
      %v1242 = vrot.slane %v800, 4
      %v1243 = vsel %vm1206, %v1240, %v1242
      %v1244 = vrot.slane %v801, 4
      %v1245 = vsel %vm1206, %v1242, %v1244
      %v1246 = vrot.slane %v802, 4
      %v1247 = vsel %vm1206, %v1244, %v1246
      %v1248 = vrot.slane %v803, 4
      %v1249 = vsel %vm1206, %v1246, %v1248
      %v1250 = vrot.slane %v804, 4
      %v1251 = vsel %vm1206, %v1248, %v1250
      %v1252 = vrot.slane %v805, 4
      %v1253 = vsel %vm1206, %v1250, %v1252
      %v1254 = vrot.slane %v806, 4
      %v1255 = vsel %vm1206, %v1252, %v1254
      %vm1256 = vcmask 261120
      %v1257 = vsel %vm1256, %v782, %v891
      %v1258 = vsel %vm1256, %v783, %v893
      %v1259 = vsel %vm1256, %v784, %v895
      %v1260 = vsel %vm1256, %v785, %v897
      %v1261 = vsel %vm1256, %v786, %v899
      %v1262 = vsel %vm1256, %v787, %v901
      %v1263 = vsel %vm1256, %v788, %v903
      %v1264 = vsel %vm1256, %v789, %v905
      %v1265 = vsel %vm1256, %v790, %v907
      %v1266 = vsel %vm1256, %v791, %v909
      %v1267 = vsel %vm1256, %v792, %v911
      %v1268 = vsel %vm1256, %v793, %v913
      %v1269 = vsel %vm1256, %v794, %v915
      %v1270 = vsel %vm1256, %v795, %v917
      %v1271 = vsel %vm1256, %v796, %v919
      %v1272 = vsel %vm1256, %v797, %v921
      %v1273 = vsel %vm1256, %v798, %v923
      %v1274 = vsel %vm1256, %v799, %v925
      %v1275 = vsel %vm1256, %v800, %v927
      %v1276 = vsel %vm1256, %v801, %v929
      %v1277 = vsel %vm1256, %v802, %v931
      %v1278 = vsel %vm1256, %v803, %v933
      %v1279 = vsel %vm1256, %v804, %v935
      %v1280 = vsel %vm1256, %v805, %v937
      %vm1281 = vcmask 523264
      %v1282 = vsel %vm1281, %v1257, %v1013
      %v1283 = vsel %vm1281, %v1258, %v1015
      %v1284 = vsel %vm1281, %v1259, %v1017
      %v1285 = vsel %vm1281, %v1260, %v1019
      %v1286 = vsel %vm1281, %v1261, %v1021
      %v1287 = vsel %vm1281, %v1262, %v1023
      %v1288 = vsel %vm1281, %v1263, %v1025
      %v1289 = vsel %vm1281, %v1264, %v1027
      %v1290 = vsel %vm1281, %v1265, %v1029
      %v1291 = vsel %vm1281, %v1266, %v1031
      %v1292 = vsel %vm1281, %v1267, %v1033
      %v1293 = vsel %vm1281, %v1268, %v1035
      %v1294 = vsel %vm1281, %v1269, %v1037
      %v1295 = vsel %vm1281, %v1270, %v1039
      %v1296 = vsel %vm1281, %v1271, %v1041
      %v1297 = vsel %vm1281, %v1272, %v1043
      %v1298 = vsel %vm1281, %v1273, %v1045
      %v1299 = vsel %vm1281, %v1274, %v1047
      %v1300 = vsel %vm1281, %v1275, %v1049
      %v1301 = vsel %vm1281, %v1276, %v1051
      %v1302 = vsel %vm1281, %v1277, %v1053
      %v1303 = vsel %vm1281, %v1278, %v1055
      %v1304 = vsel %vm1281, %v1279, %v1057
      %v1305 = vsel %vm1281, %v1280, %v1059
      %vm1306 = vcmask 785408
      %v1307 = vsel %vm1306, %v1282, %v1135
      %v1308 = vsel %vm1306, %v1283, %v1137
      %v1309 = vsel %vm1306, %v1284, %v1139
      %v1310 = vsel %vm1306, %v1285, %v1141
      %v1311 = vsel %vm1306, %v1286, %v1143
      %v1312 = vsel %vm1306, %v1287, %v1145
      %v1313 = vsel %vm1306, %v1288, %v1147
      %v1314 = vsel %vm1306, %v1289, %v1149
      %v1315 = vsel %vm1306, %v1290, %v1151
      %v1316 = vsel %vm1306, %v1291, %v1153
      %v1317 = vsel %vm1306, %v1292, %v1155
      %v1318 = vsel %vm1306, %v1293, %v1157
      %v1319 = vsel %vm1306, %v1294, %v1159
      %v1320 = vsel %vm1306, %v1295, %v1161
      %v1321 = vsel %vm1306, %v1296, %v1163
      %v1322 = vsel %vm1306, %v1297, %v1165
      %v1323 = vsel %vm1306, %v1298, %v1167
      %v1324 = vsel %vm1306, %v1299, %v1169
      %v1325 = vsel %vm1306, %v1300, %v1171
      %v1326 = vsel %vm1306, %v1301, %v1173
      %v1327 = vsel %vm1306, %v1302, %v1175
      %v1328 = vsel %vm1306, %v1303, %v1177
      %v1329 = vsel %vm1306, %v1304, %v1179
      %v1330 = vsel %vm1306, %v1305, %v1181
      %v1331 = vld [vmem:[%s5] sm:$0xff]
      %v1332 = vld [vmem:[%s5 + $0x8] sm:$0xff]
      %v1333 = vld [vmem:[%s5 + $0x10] sm:$0xff]
      %v1334 = vld [vmem:[%s5 + $0x18] sm:$0xff]
      %v1335 = vld [vmem:[%s5 + $0x20] sm:$0xff]
      %v1336 = vld [vmem:[%s5 + $0x28] sm:$0xff]
      %v1337 = vld [vmem:[%s5 + $0x30] sm:$0xff]
      %v1338 = vld [vmem:[%s5 + $0x38] sm:$0xff]
      %v1339 = vld [vmem:[%s5 + $0x40] sm:$0xff]
      %v1340 = vld [vmem:[%s5 + $0x48] sm:$0xff]
      %v1341 = vld [vmem:[%s5 + $0x50] sm:$0xff]
      %v1342 = vld [vmem:[%s5 + $0x58] sm:$0xff]
      %v1343 = vld [vmem:[%s5 + $0x60] sm:$0xff]
      %v1344 = vld [vmem:[%s5 + $0x68] sm:$0xff]
      %v1345 = vld [vmem:[%s5 + $0x70] sm:$0xff]
      %v1346 = vld [vmem:[%s5 + $0x78] sm:$0xff]
      %v1347 = vld [vmem:[%s5 + $0x80] sm:$0xff]
      %v1348 = vld [vmem:[%s5 + $0x88] sm:$0xff]
      %v1349 = vld [vmem:[%s5 + $0x90] sm:$0xff]
      %v1350 = vld [vmem:[%s5 + $0x98] sm:$0xff]
      %v1353 = vrot.slane %v807, 1
      %v1354 = vsel %vm840, %v888, %v1353
      %v1355 = vrot.slane %v808, 1
      %v1356 = vsel %vm840, %v1353, %v1355
      %1357 = vrot.lane.b32.xlu0 %v1354, 32
      %v1358 = vpop.permute.xlu0 %1357
      %1359 = vrot.lane.b32.xlu0 %v1356, 32
      %v1360 = vpop.permute.xlu0 %1359
      %v1363 = vrot.slane %v807, 2
      %v1364 = vsel %vm962, %v1010, %v1363
      %v1365 = vrot.slane %v808, 2
      %v1366 = vsel %vm962, %v1363, %v1365
      %1367 = vrot.lane.b32.xlu0 %v1364, 64
      %v1368 = vpop.permute.xlu0 %1367
      %1369 = vrot.lane.b32.xlu0 %v1366, 64
      %v1370 = vpop.permute.xlu0 %1369
      %v1373 = vrot.slane %v807, 3
      %v1374 = vsel %vm1084, %v1132, %v1373
      %v1375 = vrot.slane %v808, 3
      %v1376 = vsel %vm1084, %v1373, %v1375
      %1377 = vrot.lane.b32.xlu0 %v1374, 96
      %v1378 = vpop.permute.xlu0 %1377
      %1379 = vrot.lane.b32.xlu0 %v1376, 96
      %v1380 = vpop.permute.xlu0 %1379
      %v1383 = vrot.slane %v807, 4
      %v1384 = vsel %vm1206, %v1254, %v1383
      %v1385 = vrot.slane %v808, 4
      %v1386 = vsel %vm1206, %v1383, %v1385
      %v1387 = vsel %vm1256, %v806, %v1358
      %v1388 = vsel %vm1256, %v807, %v1360
      %v1389 = vsel %vm1281, %v1387, %v1368
      %v1390 = vsel %vm1281, %v1388, %v1370
      %v1391 = vsel %vm1306, %v1389, %v1378
      %v1392 = vsel %vm1306, %v1390, %v1380
      %s1393 = scalar_lea.vmem %s5, 160
      %v1394 = vld [vmem:[%s1393] sm:$0xff]
      %v1395 = vld [vmem:[%s1393 + $0x8] sm:$0xff]
      %v1396 = vld [vmem:[%s1393 + $0x10] sm:$0xff]
      %v1397 = vld [vmem:[%s1393 + $0x18] sm:$0xff]
      %v1398 = vld [vmem:[%s1393 + $0x20] sm:$0xff]
      %v1399 = vld [vmem:[%s1393 + $0x28] sm:$0xff]
      %v1400 = vld [vmem:[%s1393 + $0x30] sm:$0xff]
      %v1401 = vld [vmem:[%s1393 + $0x38] sm:$0xff]
      %v1402 = vld [vmem:[%s1393 + $0x40] sm:$0xff]
      %v1403 = vld [vmem:[%s1393 + $0x48] sm:$0xff]
      %v1404 = vld [vmem:[%s1393 + $0x50] sm:$0xff]
      %v1405 = vld [vmem:[%s1393 + $0x58] sm:$0xff]
      %v1406 = vld [vmem:[%s1393 + $0x60] sm:$0xff]
      %v1407 = vld [vmem:[%s1393 + $0x68] sm:$0xff]
      %v1408 = vld [vmem:[%s1393 + $0x70] sm:$0xff]
      %v1409 = vld [vmem:[%s1393 + $0x78] sm:$0xff]
      %v1410 = vld [vmem:[%s1393 + $0x80] sm:$0xff]
      %v1411 = vld [vmem:[%s1393 + $0x88] sm:$0xff]
      %v1412 = vld [vmem:[%s1393 + $0x90] sm:$0xff]
      %v1413 = vld [vmem:[%s1393 + $0x98] sm:$0xff]
      %v1414 = vsel %vm1256, %v1213, 0
      %v1416 = vsel %vm1256, %v1215, 0
      %v1418 = vsel %vm1256, %v1217, 0
      %v1420 = vsel %vm1256, %v1219, 0
      %v1422 = vsel %vm1256, %v1221, 0
      %v1424 = vsel %vm1256, %v1223, 0
      %v1426 = vsel %vm1256, %v1225, 0
      %v1428 = vsel %vm1256, %v1227, 0
      %v1430 = vsel %vm1256, %v1229, 0
      %v1432 = vsel %vm1256, %v1231, 0
      %v1434 = vsel %vm1256, %v1233, 0
      %v1436 = vsel %vm1256, %v1235, 0
      %v1438 = vsel %vm1256, %v1237, 0
      %v1440 = vsel %vm1256, %v1239, 0
      %v1442 = vsel %vm1256, %v1241, 0
      %v1444 = vsel %vm1256, %v1243, 0
      %v1446 = vsel %vm1256, %v1245, 0
      %v1448 = vsel %vm1256, %v1247, 0
      %v1450 = vsel %vm1256, %v1249, 0
      %v1452 = vsel %vm1256, %v1251, 0
      %v1454 = vsel %vm1256, %v1253, 0
      %v1456 = vsel %vm1256, %v1255, 0
      %v1458 = vsel %vm1256, %v1384, 0
      %v1460 = vsel %vm1256, %v1386, 0
      %1462 = vmatpush.msra.mxu0 %v1409
      %1463 = vmatpush.msra.mxu0 %v1408
      %1464 = vmatpush.msra.mxu0 %v1407
      %1465 = vmatpush.msra.mxu0 %v1406
      %1466 = vmatpush.msra.mxu0 %v1405
      %1467 = vmatpush.msra.mxu0 %v1404
      %1468 = vmatpush.msra.mxu0 %v1403
      %1469 = vmatpush.msra.mxu0 %v1402
      %1470 = vmatpush.msra.mxu0 %v1401
      %1471 = vmatpush.msra.mxu0 %v1400
      %1472 = vmatpush.msra.mxu0 %v1399
      %1473 = vmatpush.msra.mxu0 %v1398
      %1474 = vmatpush.msra.mxu0 %v1397
      %1475 = vmatpush.msra.mxu0 %v1396
      %1476 = vmatpush.msra.mxu0 %v1395
      %1477 = vmatpush.msra.mxu0 %v1394
      %1478 = vmatmul.f32.gmra.mxu0 %v1309
      %v1479 = vpop.f32.mrf.mxu0
      %v1480 = vadd.f32 0.0, %v1479
      %1481 = vmatmul.f32.gmra.mxu0 %v1310
      %v1482 = vpop.f32.mrf.mxu0
      %v1483 = vadd.f32 0.0, %v1482
      %1484 = vmatmul.f32.gmra.mxu0 %v1311
      %v1485 = vpop.f32.mrf.mxu0
      %v1486 = vadd.f32 0.0, %v1485
      %1487 = vmatmul.f32.gmra.mxu0 %v1312
      %v1488 = vpop.f32.mrf.mxu0
      %v1489 = vadd.f32 0.0, %v1488
      %1490 = vmatmul.f32.gmra.mxu0 %v1313
      %v1491 = vpop.f32.mrf.mxu0
      %v1492 = vadd.f32 0.0, %v1491
      %1493 = vmatmul.f32.gmra.mxu0 %v1314
      %v1494 = vpop.f32.mrf.mxu0
      %v1495 = vadd.f32 0.0, %v1494
      %1496 = vmatmul.f32.gmra.mxu0 %v1315
      %v1497 = vpop.f32.mrf.mxu0
      %v1498 = vadd.f32 0.0, %v1497
      %1499 = vmatmul.f32.gmra.mxu0 %v1316
      %v1500 = vpop.f32.mrf.mxu0
      %v1501 = vadd.f32 0.0, %v1500
      %1502 = vmatmul.f32.gmra.mxu0 %v1317
      %v1503 = vpop.f32.mrf.mxu0
      %v1504 = vadd.f32 0.0, %v1503
      %1505 = vmatmul.f32.gmra.mxu0 %v1318
      %v1506 = vpop.f32.mrf.mxu0
      %v1507 = vadd.f32 0.0, %v1506
      %1508 = vmatmul.f32.gmra.mxu0 %v1319
      %v1509 = vpop.f32.mrf.mxu0
      %v1510 = vadd.f32 0.0, %v1509
      %1511 = vmatmul.f32.gmra.mxu0 %v1320
      %v1512 = vpop.f32.mrf.mxu0
      %v1513 = vadd.f32 0.0, %v1512
      %1514 = vmatmul.f32.gmra.mxu0 %v1321
      %v1515 = vpop.f32.mrf.mxu0
      %v1516 = vadd.f32 0.0, %v1515
      %1517 = vmatmul.f32.gmra.mxu0 %v1322
      %v1518 = vpop.f32.mrf.mxu0
      %v1519 = vadd.f32 0.0, %v1518
      %1520 = vmatmul.f32.gmra.mxu0 %v1323
      %v1521 = vpop.f32.mrf.mxu0
      %v1522 = vadd.f32 0.0, %v1521
      %1523 = vmatmul.f32.gmra.mxu0 %v1324
      %v1524 = vpop.f32.mrf.mxu0
      %v1525 = vadd.f32 0.0, %v1524
      %1526 = vmatmul.f32.gmra.mxu0 %v1325
      %v1527 = vpop.f32.mrf.mxu0
      %v1528 = vadd.f32 0.0, %v1527
      %1529 = vmatmul.f32.gmra.mxu0 %v1326
      %v1530 = vpop.f32.mrf.mxu0
      %v1531 = vadd.f32 0.0, %v1530
      %1532 = vmatmul.f32.gmra.mxu0 %v1327
      %v1533 = vpop.f32.mrf.mxu0
      %v1534 = vadd.f32 0.0, %v1533
      %1535 = vmatmul.f32.gmra.mxu0 %v1328
      %v1536 = vpop.f32.mrf.mxu0
      %v1537 = vadd.f32 0.0, %v1536
      %1538 = vmatmul.f32.gmra.mxu0 %v1329
      %v1539 = vpop.f32.mrf.mxu0
      %v1540 = vadd.f32 0.0, %v1539
      %1541 = vmatmul.f32.gmra.mxu0 %v1330
      %v1542 = vpop.f32.mrf.mxu0
      %v1543 = vadd.f32 0.0, %v1542
      %1544 = vmatmul.f32.gmra.mxu0 %v1391
      %v1545 = vpop.f32.mrf.mxu0
      %v1546 = vadd.f32 0.0, %v1545
      %1547 = vmatmul.f32.gmra.mxu0 %v1392
      %v1548 = vpop.f32.mrf.mxu0
      %v1549 = vadd.f32 0.0, %v1548
      %1550 = vdwg.mxu0
      %1551 = vmatpush.msra.mxu0 0.0
      %1552 = vmatpush.msra.mxu0 0.0
      %1553 = vmatpush.msra.mxu0 0.0
      %1554 = vmatpush.msra.mxu0 0.0
      %1555 = vmatpush.msra.mxu0 0.0
      %1556 = vmatpush.msra.mxu0 0.0
      %1557 = vmatpush.msra.mxu0 0.0
      %1558 = vmatpush.msra.mxu0 0.0
      %1559 = vmatpush.msra.mxu0 0.0
      %1560 = vmatpush.msra.mxu0 0.0
      %1561 = vmatpush.msra.mxu0 0.0
      %1562 = vmatpush.msra.mxu0 0.0
      %1563 = vmatpush.msra.mxu0 %v1413
      %1564 = vmatpush.msra.mxu0 %v1412
      %1565 = vmatpush.msra.mxu0 %v1411
      %1566 = vmatpush.msra.mxu0 %v1410
      %1567 = vmatmul.f32.gmra.mxu0 %v1414
      %v1568 = vpop.f32.mrf.mxu0
      %v1569 = vadd.f32 %v1480, %v1568
      %1570 = vmatmul.f32.gmra.mxu0 %v1416
      %v1571 = vpop.f32.mrf.mxu0
      %v1572 = vadd.f32 %v1483, %v1571
      %1573 = vmatmul.f32.gmra.mxu0 %v1418
      %v1574 = vpop.f32.mrf.mxu0
      %v1575 = vadd.f32 %v1486, %v1574
      %1576 = vmatmul.f32.gmra.mxu0 %v1420
      %v1577 = vpop.f32.mrf.mxu0
      %v1578 = vadd.f32 %v1489, %v1577
      %1579 = vmatmul.f32.gmra.mxu0 %v1422
      %v1580 = vpop.f32.mrf.mxu0
      %v1581 = vadd.f32 %v1492, %v1580
      %1582 = vmatmul.f32.gmra.mxu0 %v1424
      %v1583 = vpop.f32.mrf.mxu0
      %v1584 = vadd.f32 %v1495, %v1583
      %1585 = vmatmul.f32.gmra.mxu0 %v1426
      %v1586 = vpop.f32.mrf.mxu0
      %v1587 = vadd.f32 %v1498, %v1586
      %1588 = vmatmul.f32.gmra.mxu0 %v1428
      %v1589 = vpop.f32.mrf.mxu0
      %v1590 = vadd.f32 %v1501, %v1589
      %1591 = vmatmul.f32.gmra.mxu0 %v1430
      %v1592 = vpop.f32.mrf.mxu0
      %v1593 = vadd.f32 %v1504, %v1592
      %1594 = vmatmul.f32.gmra.mxu0 %v1432
      %v1595 = vpop.f32.mrf.mxu0
      %v1596 = vadd.f32 %v1507, %v1595
      %1597 = vmatmul.f32.gmra.mxu0 %v1434
      %v1598 = vpop.f32.mrf.mxu0
      %v1599 = vadd.f32 %v1510, %v1598
      %1600 = vmatmul.f32.gmra.mxu0 %v1436
      %v1601 = vpop.f32.mrf.mxu0
      %v1602 = vadd.f32 %v1513, %v1601
      %1603 = vmatmul.f32.gmra.mxu0 %v1438
      %v1604 = vpop.f32.mrf.mxu0
      %v1605 = vadd.f32 %v1516, %v1604
      %1606 = vmatmul.f32.gmra.mxu0 %v1440
      %v1607 = vpop.f32.mrf.mxu0
      %v1608 = vadd.f32 %v1519, %v1607
      %1609 = vmatmul.f32.gmra.mxu0 %v1442
      %v1610 = vpop.f32.mrf.mxu0
      %v1611 = vadd.f32 %v1522, %v1610
      %1612 = vmatmul.f32.gmra.mxu0 %v1444
      %v1613 = vpop.f32.mrf.mxu0
      %v1614 = vadd.f32 %v1525, %v1613
      %1615 = vmatmul.f32.gmra.mxu0 %v1446
      %v1616 = vpop.f32.mrf.mxu0
      %v1617 = vadd.f32 %v1528, %v1616
      %1618 = vmatmul.f32.gmra.mxu0 %v1448
      %v1619 = vpop.f32.mrf.mxu0
      %v1620 = vadd.f32 %v1531, %v1619
      %1621 = vmatmul.f32.gmra.mxu0 %v1450
      %v1622 = vpop.f32.mrf.mxu0
      %v1623 = vadd.f32 %v1534, %v1622
      %1624 = vmatmul.f32.gmra.mxu0 %v1452
      %v1625 = vpop.f32.mrf.mxu0
      %v1626 = vadd.f32 %v1537, %v1625
      %1627 = vmatmul.f32.gmra.mxu0 %v1454
      %v1628 = vpop.f32.mrf.mxu0
      %v1629 = vadd.f32 %v1540, %v1628
      %1630 = vmatmul.f32.gmra.mxu0 %v1456
      %v1631 = vpop.f32.mrf.mxu0
      %v1632 = vadd.f32 %v1543, %v1631
      %1633 = vmatmul.f32.gmra.mxu0 %v1458
      %v1634 = vpop.f32.mrf.mxu0
      %v1635 = vadd.f32 %v1546, %v1634
      %1636 = vmatmul.f32.gmra.mxu0 %v1460
      %v1637 = vpop.f32.mrf.mxu0
      %v1638 = vadd.f32 %v1549, %v1637
      %1639 = vdwg.mxu0
      %v1640 = vsel %vm1256, %v1209, 0
      %v1642 = vsel %vm1256, %v1211, 0
      %1644 = vmatpush.msra.mxu0 %v1346
      %1645 = vmatpush.msra.mxu0 %v1345
      %1646 = vmatpush.msra.mxu0 %v1344
      %1647 = vmatpush.msra.mxu0 %v1343
      %1648 = vmatpush.msra.mxu0 %v1342
      %1649 = vmatpush.msra.mxu0 %v1341
      %1650 = vmatpush.msra.mxu0 %v1340
      %1651 = vmatpush.msra.mxu0 %v1339
      %1652 = vmatpush.msra.mxu0 %v1338
      %1653 = vmatpush.msra.mxu0 %v1337
      %1654 = vmatpush.msra.mxu0 %v1336
      %1655 = vmatpush.msra.mxu0 %v1335
      %1656 = vmatpush.msra.mxu0 %v1334
      %1657 = vmatpush.msra.mxu0 %v1333
      %1658 = vmatpush.msra.mxu0 %v1332
      %1659 = vmatpush.msra.mxu0 %v1331
      %1660 = vmatmul.f32.gmra.mxu0 %v1307
      %v1661 = vpop.f32.mrf.mxu0
      %v1662 = vadd.f32 %v1569, %v1661
      %1663 = vmatmul.f32.gmra.mxu0 %v1308
      %v1664 = vpop.f32.mrf.mxu0
      %v1665 = vadd.f32 %v1572, %v1664
      %1666 = vmatmul.f32.gmra.mxu0 %v1309
      %v1667 = vpop.f32.mrf.mxu0
      %v1668 = vadd.f32 %v1575, %v1667
      %1669 = vmatmul.f32.gmra.mxu0 %v1310
      %v1670 = vpop.f32.mrf.mxu0
      %v1671 = vadd.f32 %v1578, %v1670
      %1672 = vmatmul.f32.gmra.mxu0 %v1311
      %v1673 = vpop.f32.mrf.mxu0
      %v1674 = vadd.f32 %v1581, %v1673
      %1675 = vmatmul.f32.gmra.mxu0 %v1312
      %v1676 = vpop.f32.mrf.mxu0
      %v1677 = vadd.f32 %v1584, %v1676
      %1678 = vmatmul.f32.gmra.mxu0 %v1313
      %v1679 = vpop.f32.mrf.mxu0
      %v1680 = vadd.f32 %v1587, %v1679
      %1681 = vmatmul.f32.gmra.mxu0 %v1314
      %v1682 = vpop.f32.mrf.mxu0
      %v1683 = vadd.f32 %v1590, %v1682
      %1684 = vmatmul.f32.gmra.mxu0 %v1315
      %v1685 = vpop.f32.mrf.mxu0
      %v1686 = vadd.f32 %v1593, %v1685
      %1687 = vmatmul.f32.gmra.mxu0 %v1316
      %v1688 = vpop.f32.mrf.mxu0
      %v1689 = vadd.f32 %v1596, %v1688
      %1690 = vmatmul.f32.gmra.mxu0 %v1317
      %v1691 = vpop.f32.mrf.mxu0
      %v1692 = vadd.f32 %v1599, %v1691
      %1693 = vmatmul.f32.gmra.mxu0 %v1318
      %v1694 = vpop.f32.mrf.mxu0
      %v1695 = vadd.f32 %v1602, %v1694
      %1696 = vmatmul.f32.gmra.mxu0 %v1319
      %v1697 = vpop.f32.mrf.mxu0
      %v1698 = vadd.f32 %v1605, %v1697
      %1699 = vmatmul.f32.gmra.mxu0 %v1320
      %v1700 = vpop.f32.mrf.mxu0
      %v1701 = vadd.f32 %v1608, %v1700
      %1702 = vmatmul.f32.gmra.mxu0 %v1321
      %v1703 = vpop.f32.mrf.mxu0
      %v1704 = vadd.f32 %v1611, %v1703
      %1705 = vmatmul.f32.gmra.mxu0 %v1322
      %v1706 = vpop.f32.mrf.mxu0
      %v1707 = vadd.f32 %v1614, %v1706
      %1708 = vmatmul.f32.gmra.mxu0 %v1323
      %v1709 = vpop.f32.mrf.mxu0
      %v1710 = vadd.f32 %v1617, %v1709
      %1711 = vmatmul.f32.gmra.mxu0 %v1324
      %v1712 = vpop.f32.mrf.mxu0
      %v1713 = vadd.f32 %v1620, %v1712
      %1714 = vmatmul.f32.gmra.mxu0 %v1325
      %v1715 = vpop.f32.mrf.mxu0
      %v1716 = vadd.f32 %v1623, %v1715
      %1717 = vmatmul.f32.gmra.mxu0 %v1326
      %v1718 = vpop.f32.mrf.mxu0
      %v1719 = vadd.f32 %v1626, %v1718
      %1720 = vmatmul.f32.gmra.mxu0 %v1327
      %v1721 = vpop.f32.mrf.mxu0
      %v1722 = vadd.f32 %v1629, %v1721
      %1723 = vmatmul.f32.gmra.mxu0 %v1328
      %v1724 = vpop.f32.mrf.mxu0
      %v1725 = vadd.f32 %v1632, %v1724
      %1726 = vmatmul.f32.gmra.mxu0 %v1329
      %v1727 = vpop.f32.mrf.mxu0
      %v1728 = vadd.f32 %v1635, %v1727
      %1729 = vmatmul.f32.gmra.mxu0 %v1330
      %v1730 = vpop.f32.mrf.mxu0
      %v1731 = vadd.f32 %v1638, %v1730
      %1732 = vdwg.mxu0
      %1733 = vmatpush.msra.mxu0 0.0
      %1734 = vmatpush.msra.mxu0 0.0
      %1735 = vmatpush.msra.mxu0 0.0
      %1736 = vmatpush.msra.mxu0 0.0
      %1737 = vmatpush.msra.mxu0 0.0
      %1738 = vmatpush.msra.mxu0 0.0
      %1739 = vmatpush.msra.mxu0 0.0
      %1740 = vmatpush.msra.mxu0 0.0
      %1741 = vmatpush.msra.mxu0 0.0
      %1742 = vmatpush.msra.mxu0 0.0
      %1743 = vmatpush.msra.mxu0 0.0
      %1744 = vmatpush.msra.mxu0 0.0
      %1745 = vmatpush.msra.mxu0 %v1350
      %1746 = vmatpush.msra.mxu0 %v1349
      %1747 = vmatpush.msra.mxu0 %v1348
      %1748 = vmatpush.msra.mxu0 %v1347
      %1749 = vmatmul.f32.gmra.mxu0 %v1640
      %v1750 = vpop.f32.mrf.mxu0
      %v1751 = vadd.f32 %v1662, %v1750
      %1752 = vmatmul.f32.gmra.mxu0 %v1642
      %v1753 = vpop.f32.mrf.mxu0
      %v1754 = vadd.f32 %v1665, %v1753
      %1755 = vmatmul.f32.gmra.mxu0 %v1414
      %v1756 = vpop.f32.mrf.mxu0
      %v1757 = vadd.f32 %v1668, %v1756
      %1758 = vmatmul.f32.gmra.mxu0 %v1416
      %v1759 = vpop.f32.mrf.mxu0
      %v1760 = vadd.f32 %v1671, %v1759
      %1761 = vmatmul.f32.gmra.mxu0 %v1418
      %v1762 = vpop.f32.mrf.mxu0
      %v1763 = vadd.f32 %v1674, %v1762
      %1764 = vmatmul.f32.gmra.mxu0 %v1420
      %v1765 = vpop.f32.mrf.mxu0
      %v1766 = vadd.f32 %v1677, %v1765
      %1767 = vmatmul.f32.gmra.mxu0 %v1422
      %v1768 = vpop.f32.mrf.mxu0
      %v1769 = vadd.f32 %v1680, %v1768
      %1770 = vmatmul.f32.gmra.mxu0 %v1424
      %v1771 = vpop.f32.mrf.mxu0
      %v1772 = vadd.f32 %v1683, %v1771
      %1773 = vmatmul.f32.gmra.mxu0 %v1426
      %v1774 = vpop.f32.mrf.mxu0
      %v1775 = vadd.f32 %v1686, %v1774
      %1776 = vmatmul.f32.gmra.mxu0 %v1428
      %v1777 = vpop.f32.mrf.mxu0
      %v1778 = vadd.f32 %v1689, %v1777
      %1779 = vmatmul.f32.gmra.mxu0 %v1430
      %v1780 = vpop.f32.mrf.mxu0
      %v1781 = vadd.f32 %v1692, %v1780
      %1782 = vmatmul.f32.gmra.mxu0 %v1432
      %v1783 = vpop.f32.mrf.mxu0
      %v1784 = vadd.f32 %v1695, %v1783
      %1785 = vmatmul.f32.gmra.mxu0 %v1434
      %v1786 = vpop.f32.mrf.mxu0
      %v1787 = vadd.f32 %v1698, %v1786
      %1788 = vmatmul.f32.gmra.mxu0 %v1436
      %v1789 = vpop.f32.mrf.mxu0
      %v1790 = vadd.f32 %v1701, %v1789
      %1791 = vmatmul.f32.gmra.mxu0 %v1438
      %v1792 = vpop.f32.mrf.mxu0
      %v1793 = vadd.f32 %v1704, %v1792
      %1794 = vmatmul.f32.gmra.mxu0 %v1440
      %v1795 = vpop.f32.mrf.mxu0
      %v1796 = vadd.f32 %v1707, %v1795
      %1797 = vmatmul.f32.gmra.mxu0 %v1442
      %v1798 = vpop.f32.mrf.mxu0
      %v1799 = vadd.f32 %v1710, %v1798
      %1800 = vmatmul.f32.gmra.mxu0 %v1444
      %v1801 = vpop.f32.mrf.mxu0
      %v1802 = vadd.f32 %v1713, %v1801
      %1803 = vmatmul.f32.gmra.mxu0 %v1446
      %v1804 = vpop.f32.mrf.mxu0
      %v1805 = vadd.f32 %v1716, %v1804
      %1806 = vmatmul.f32.gmra.mxu0 %v1448
      %v1807 = vpop.f32.mrf.mxu0
      %v1808 = vadd.f32 %v1719, %v1807
      %1809 = vmatmul.f32.gmra.mxu0 %v1450
      %v1810 = vpop.f32.mrf.mxu0
      %v1811 = vadd.f32 %v1722, %v1810
      %1812 = vmatmul.f32.gmra.mxu0 %v1452
      %v1813 = vpop.f32.mrf.mxu0
      %v1814 = vadd.f32 %v1725, %v1813
      %1815 = vmatmul.f32.gmra.mxu0 %v1454
      %v1816 = vpop.f32.mrf.mxu0
      %v1817 = vadd.f32 %v1728, %v1816
      %1818 = vmatmul.f32.gmra.mxu0 %v1456
      %v1819 = vpop.f32.mrf.mxu0
      %v1820 = vadd.f32 %v1731, %v1819
      %1821 = vdwg.mxu0
      %v1824 = vrot.slane %v809, 1
      %v1825 = vsel %vm840, %v1355, %v1824
      %v1826 = vrot.slane %v810, 1
      %v1827 = vsel %vm840, %v1824, %v1826
      %1828 = vrot.lane.b32.xlu0 %v1825, 32
      %v1829 = vpop.permute.xlu0 %1828
      %1830 = vrot.lane.b32.xlu0 %v1827, 32
      %v1831 = vpop.permute.xlu0 %1830
      %v1834 = vrot.slane %v809, 2
      %v1835 = vsel %vm962, %v1365, %v1834
      %v1836 = vrot.slane %v810, 2
      %v1837 = vsel %vm962, %v1834, %v1836
      %1838 = vrot.lane.b32.xlu0 %v1835, 64
      %v1839 = vpop.permute.xlu0 %1838
      %1840 = vrot.lane.b32.xlu0 %v1837, 64
      %v1841 = vpop.permute.xlu0 %1840
      %v1844 = vrot.slane %v809, 3
      %v1845 = vsel %vm1084, %v1375, %v1844
      %v1846 = vrot.slane %v810, 3
      %v1847 = vsel %vm1084, %v1844, %v1846
      %1848 = vrot.lane.b32.xlu0 %v1845, 96
      %v1849 = vpop.permute.xlu0 %1848
      %1850 = vrot.lane.b32.xlu0 %v1847, 96
      %v1851 = vpop.permute.xlu0 %1850
      %v1854 = vrot.slane %v809, 4
      %v1855 = vsel %vm1206, %v1385, %v1854
      %v1856 = vrot.slane %v810, 4
      %v1857 = vsel %vm1206, %v1854, %v1856
      %v1858 = vsel %vm1256, %v808, %v1829
      %v1859 = vsel %vm1256, %v809, %v1831
      %v1860 = vsel %vm1281, %v1858, %v1839
      %v1861 = vsel %vm1281, %v1859, %v1841
      %v1862 = vsel %vm1306, %v1860, %v1849
      %v1863 = vsel %vm1306, %v1861, %v1851
      %s1864 = scalar_lea.vmem %s5, 320
      %v1865 = vld [vmem:[%s1864] sm:$0xff]
      %v1866 = vld [vmem:[%s1864 + $0x8] sm:$0xff]
      %v1867 = vld [vmem:[%s1864 + $0x10] sm:$0xff]
      %v1868 = vld [vmem:[%s1864 + $0x18] sm:$0xff]
      %v1869 = vld [vmem:[%s1864 + $0x20] sm:$0xff]
      %v1870 = vld [vmem:[%s1864 + $0x28] sm:$0xff]
      %v1871 = vld [vmem:[%s1864 + $0x30] sm:$0xff]
      %v1872 = vld [vmem:[%s1864 + $0x38] sm:$0xff]
      %v1873 = vld [vmem:[%s1864 + $0x40] sm:$0xff]
      %v1874 = vld [vmem:[%s1864 + $0x48] sm:$0xff]
      %v1875 = vld [vmem:[%s1864 + $0x50] sm:$0xff]
      %v1876 = vld [vmem:[%s1864 + $0x58] sm:$0xff]
      %v1877 = vld [vmem:[%s1864 + $0x60] sm:$0xff]
      %v1878 = vld [vmem:[%s1864 + $0x68] sm:$0xff]
      %v1879 = vld [vmem:[%s1864 + $0x70] sm:$0xff]
      %v1880 = vld [vmem:[%s1864 + $0x78] sm:$0xff]
      %v1881 = vld [vmem:[%s1864 + $0x80] sm:$0xff]
      %v1882 = vld [vmem:[%s1864 + $0x88] sm:$0xff]
      %v1883 = vld [vmem:[%s1864 + $0x90] sm:$0xff]
      %v1884 = vld [vmem:[%s1864 + $0x98] sm:$0xff]
      %v1885 = vsel %vm1256, %v1855, 0
      %v1887 = vsel %vm1256, %v1857, 0
      %1889 = vmatpush.msra.mxu0 %v1880
      %1890 = vmatpush.msra.mxu0 %v1879
      %1891 = vmatpush.msra.mxu0 %v1878
      %1892 = vmatpush.msra.mxu0 %v1877
      %1893 = vmatpush.msra.mxu0 %v1876
      %1894 = vmatpush.msra.mxu0 %v1875
      %1895 = vmatpush.msra.mxu0 %v1874
      %1896 = vmatpush.msra.mxu0 %v1873
      %1897 = vmatpush.msra.mxu0 %v1872
      %1898 = vmatpush.msra.mxu0 %v1871
      %1899 = vmatpush.msra.mxu0 %v1870
      %1900 = vmatpush.msra.mxu0 %v1869
      %1901 = vmatpush.msra.mxu0 %v1868
      %1902 = vmatpush.msra.mxu0 %v1867
      %1903 = vmatpush.msra.mxu0 %v1866
      %1904 = vmatpush.msra.mxu0 %v1865
      %1905 = vmatmul.f32.gmra.mxu0 %v1311
      %v1906 = vpop.f32.mrf.mxu0
      %v1907 = vadd.f32 0.0, %v1906
      %1908 = vmatmul.f32.gmra.mxu0 %v1312
      %v1909 = vpop.f32.mrf.mxu0
      %v1910 = vadd.f32 0.0, %v1909
      %1911 = vmatmul.f32.gmra.mxu0 %v1313
      %v1912 = vpop.f32.mrf.mxu0
      %v1913 = vadd.f32 0.0, %v1912
      %1914 = vmatmul.f32.gmra.mxu0 %v1314
      %v1915 = vpop.f32.mrf.mxu0
      %v1916 = vadd.f32 0.0, %v1915
      %1917 = vmatmul.f32.gmra.mxu0 %v1315
      %v1918 = vpop.f32.mrf.mxu0
      %v1919 = vadd.f32 0.0, %v1918
      %1920 = vmatmul.f32.gmra.mxu0 %v1316
      %v1921 = vpop.f32.mrf.mxu0
      %v1922 = vadd.f32 0.0, %v1921
      %1923 = vmatmul.f32.gmra.mxu0 %v1317
      %v1924 = vpop.f32.mrf.mxu0
      %v1925 = vadd.f32 0.0, %v1924
      %1926 = vmatmul.f32.gmra.mxu0 %v1318
      %v1927 = vpop.f32.mrf.mxu0
      %v1928 = vadd.f32 0.0, %v1927
      %1929 = vmatmul.f32.gmra.mxu0 %v1319
      %v1930 = vpop.f32.mrf.mxu0
      %v1931 = vadd.f32 0.0, %v1930
      %1932 = vmatmul.f32.gmra.mxu0 %v1320
      %v1933 = vpop.f32.mrf.mxu0
      %v1934 = vadd.f32 0.0, %v1933
      %1935 = vmatmul.f32.gmra.mxu0 %v1321
      %v1936 = vpop.f32.mrf.mxu0
      %v1937 = vadd.f32 0.0, %v1936
      %1938 = vmatmul.f32.gmra.mxu0 %v1322
      %v1939 = vpop.f32.mrf.mxu0
      %v1940 = vadd.f32 0.0, %v1939
      %1941 = vmatmul.f32.gmra.mxu0 %v1323
      %v1942 = vpop.f32.mrf.mxu0
      %v1943 = vadd.f32 0.0, %v1942
      %1944 = vmatmul.f32.gmra.mxu0 %v1324
      %v1945 = vpop.f32.mrf.mxu0
      %v1946 = vadd.f32 0.0, %v1945
      %1947 = vmatmul.f32.gmra.mxu0 %v1325
      %v1948 = vpop.f32.mrf.mxu0
      %v1949 = vadd.f32 0.0, %v1948
      %1950 = vmatmul.f32.gmra.mxu0 %v1326
      %v1951 = vpop.f32.mrf.mxu0
      %v1952 = vadd.f32 0.0, %v1951
      %1953 = vmatmul.f32.gmra.mxu0 %v1327
      %v1954 = vpop.f32.mrf.mxu0
      %v1955 = vadd.f32 0.0, %v1954
      %1956 = vmatmul.f32.gmra.mxu0 %v1328
      %v1957 = vpop.f32.mrf.mxu0
      %v1958 = vadd.f32 0.0, %v1957
      %1959 = vmatmul.f32.gmra.mxu0 %v1329
      %v1960 = vpop.f32.mrf.mxu0
      %v1961 = vadd.f32 0.0, %v1960
      %1962 = vmatmul.f32.gmra.mxu0 %v1330
      %v1963 = vpop.f32.mrf.mxu0
      %v1964 = vadd.f32 0.0, %v1963
      %1965 = vmatmul.f32.gmra.mxu0 %v1391
      %v1966 = vpop.f32.mrf.mxu0
      %v1967 = vadd.f32 0.0, %v1966
      %1968 = vmatmul.f32.gmra.mxu0 %v1392
      %v1969 = vpop.f32.mrf.mxu0
      %v1970 = vadd.f32 0.0, %v1969
      %1971 = vmatmul.f32.gmra.mxu0 %v1862
      %v1972 = vpop.f32.mrf.mxu0
      %v1973 = vadd.f32 0.0, %v1972
      %1974 = vmatmul.f32.gmra.mxu0 %v1863
      %v1975 = vpop.f32.mrf.mxu0
      %v1976 = vadd.f32 0.0, %v1975
      %1977 = vdwg.mxu0
      %1978 = vmatpush.msra.mxu0 0.0
      %1979 = vmatpush.msra.mxu0 0.0
      %1980 = vmatpush.msra.mxu0 0.0
      %1981 = vmatpush.msra.mxu0 0.0
      %1982 = vmatpush.msra.mxu0 0.0
      %1983 = vmatpush.msra.mxu0 0.0
      %1984 = vmatpush.msra.mxu0 0.0
      %1985 = vmatpush.msra.mxu0 0.0
      %1986 = vmatpush.msra.mxu0 0.0
      %1987 = vmatpush.msra.mxu0 0.0
      %1988 = vmatpush.msra.mxu0 0.0
      %1989 = vmatpush.msra.mxu0 0.0
      %1990 = vmatpush.msra.mxu0 %v1884
      %1991 = vmatpush.msra.mxu0 %v1883
      %1992 = vmatpush.msra.mxu0 %v1882
      %1993 = vmatpush.msra.mxu0 %v1881
      %1994 = vmatmul.f32.gmra.mxu0 %v1418
      %v1995 = vpop.f32.mrf.mxu0
      %v1996 = vadd.f32 %v1907, %v1995
      %1997 = vmatmul.f32.gmra.mxu0 %v1420
      %v1998 = vpop.f32.mrf.mxu0
      %v1999 = vadd.f32 %v1910, %v1998
      %2000 = vmatmul.f32.gmra.mxu0 %v1422
      %v2001 = vpop.f32.mrf.mxu0
      %v2002 = vadd.f32 %v1913, %v2001
      %2003 = vmatmul.f32.gmra.mxu0 %v1424
      %v2004 = vpop.f32.mrf.mxu0
      %v2005 = vadd.f32 %v1916, %v2004
      %2006 = vmatmul.f32.gmra.mxu0 %v1426
      %v2007 = vpop.f32.mrf.mxu0
      %v2008 = vadd.f32 %v1919, %v2007
      %2009 = vmatmul.f32.gmra.mxu0 %v1428
      %v2010 = vpop.f32.mrf.mxu0
      %v2011 = vadd.f32 %v1922, %v2010
      %2012 = vmatmul.f32.gmra.mxu0 %v1430
      %v2013 = vpop.f32.mrf.mxu0
      %v2014 = vadd.f32 %v1925, %v2013
      %2015 = vmatmul.f32.gmra.mxu0 %v1432
      %v2016 = vpop.f32.mrf.mxu0
      %v2017 = vadd.f32 %v1928, %v2016
      %2018 = vmatmul.f32.gmra.mxu0 %v1434
      %v2019 = vpop.f32.mrf.mxu0
      %v2020 = vadd.f32 %v1931, %v2019
      %2021 = vmatmul.f32.gmra.mxu0 %v1436
      %v2022 = vpop.f32.mrf.mxu0
      %v2023 = vadd.f32 %v1934, %v2022
      %2024 = vmatmul.f32.gmra.mxu0 %v1438
      %v2025 = vpop.f32.mrf.mxu0
      %v2026 = vadd.f32 %v1937, %v2025
      %2027 = vmatmul.f32.gmra.mxu0 %v1440
      %v2028 = vpop.f32.mrf.mxu0
      %v2029 = vadd.f32 %v1940, %v2028
      %2030 = vmatmul.f32.gmra.mxu0 %v1442
      %v2031 = vpop.f32.mrf.mxu0
      %v2032 = vadd.f32 %v1943, %v2031
      %2033 = vmatmul.f32.gmra.mxu0 %v1444
      %v2034 = vpop.f32.mrf.mxu0
      %v2035 = vadd.f32 %v1946, %v2034
      %2036 = vmatmul.f32.gmra.mxu0 %v1446
      %v2037 = vpop.f32.mrf.mxu0
      %v2038 = vadd.f32 %v1949, %v2037
      %2039 = vmatmul.f32.gmra.mxu0 %v1448
      %v2040 = vpop.f32.mrf.mxu0
      %v2041 = vadd.f32 %v1952, %v2040
      %2042 = vmatmul.f32.gmra.mxu0 %v1450
      %v2043 = vpop.f32.mrf.mxu0
      %v2044 = vadd.f32 %v1955, %v2043
      %2045 = vmatmul.f32.gmra.mxu0 %v1452
      %v2046 = vpop.f32.mrf.mxu0
      %v2047 = vadd.f32 %v1958, %v2046
      %2048 = vmatmul.f32.gmra.mxu0 %v1454
      %v2049 = vpop.f32.mrf.mxu0
      %v2050 = vadd.f32 %v1961, %v2049
      %2051 = vmatmul.f32.gmra.mxu0 %v1456
      %v2052 = vpop.f32.mrf.mxu0
      %v2053 = vadd.f32 %v1964, %v2052
      %2054 = vmatmul.f32.gmra.mxu0 %v1458
      %v2055 = vpop.f32.mrf.mxu0
      %v2056 = vadd.f32 %v1967, %v2055
      %2057 = vmatmul.f32.gmra.mxu0 %v1460
      %v2058 = vpop.f32.mrf.mxu0
      %v2059 = vadd.f32 %v1970, %v2058
      %2060 = vmatmul.f32.gmra.mxu0 %v1885
      %v2061 = vpop.f32.mrf.mxu0
      %v2062 = vadd.f32 %v1973, %v2061
      %2063 = vmatmul.f32.gmra.mxu0 %v1887
      %v2064 = vpop.f32.mrf.mxu0
      %v2065 = vadd.f32 %v1976, %v2064
      %2066 = vdwg.mxu0
      %v2067 = vadd.f32 %v1751, %v1996
      %v2068 = vadd.f32 %v1754, %v1999
      %v2069 = vadd.f32 %v1757, %v2002
      %v2070 = vadd.f32 %v1760, %v2005
      %v2071 = vadd.f32 %v1763, %v2008
      %v2072 = vadd.f32 %v1766, %v2011
      %v2073 = vadd.f32 %v1769, %v2014
      %v2074 = vadd.f32 %v1772, %v2017
      %v2075 = vadd.f32 %v1775, %v2020
      %v2076 = vadd.f32 %v1778, %v2023
      %v2077 = vadd.f32 %v1781, %v2026
      %v2078 = vadd.f32 %v1784, %v2029
      %v2079 = vadd.f32 %v1787, %v2032
      %v2080 = vadd.f32 %v1790, %v2035
      %v2081 = vadd.f32 %v1793, %v2038
      %v2082 = vadd.f32 %v1796, %v2041
      %v2083 = vadd.f32 %v1799, %v2044
      %v2084 = vadd.f32 %v1802, %v2047
      %v2085 = vadd.f32 %v1805, %v2050
      %v2086 = vadd.f32 %v1808, %v2053
      %v2087 = vadd.f32 %v1811, %v2056
      %v2088 = vadd.f32 %v1814, %v2059
      %v2089 = vadd.f32 %v1817, %v2062
      %v2090 = vadd.f32 %v1820, %v2065
      %v2093 = vrot.slane %v811, 1
      %v2094 = vsel %vm840, %v1826, %v2093
      %v2095 = vrot.slane %v812, 1
      %v2096 = vsel %vm840, %v2093, %v2095
      %2097 = vrot.lane.b32.xlu0 %v2094, 32
      %v2098 = vpop.permute.xlu0 %2097
      %2099 = vrot.lane.b32.xlu0 %v2096, 32
      %v2100 = vpop.permute.xlu0 %2099
      %v2103 = vrot.slane %v811, 2
      %v2104 = vsel %vm962, %v1836, %v2103
      %v2105 = vrot.slane %v812, 2
      %v2106 = vsel %vm962, %v2103, %v2105
      %2107 = vrot.lane.b32.xlu0 %v2104, 64
      %v2108 = vpop.permute.xlu0 %2107
      %2109 = vrot.lane.b32.xlu0 %v2106, 64
      %v2110 = vpop.permute.xlu0 %2109
      %v2113 = vrot.slane %v811, 3
      %v2114 = vsel %vm1084, %v1846, %v2113
      %v2115 = vrot.slane %v812, 3
      %v2116 = vsel %vm1084, %v2113, %v2115
      %2117 = vrot.lane.b32.xlu0 %v2114, 96
      %v2118 = vpop.permute.xlu0 %2117
      %2119 = vrot.lane.b32.xlu0 %v2116, 96
      %v2120 = vpop.permute.xlu0 %2119
      %v2123 = vrot.slane %v811, 4
      %v2124 = vsel %vm1206, %v1856, %v2123
      %v2125 = vrot.slane %v812, 4
      %v2126 = vsel %vm1206, %v2123, %v2125
      %v2127 = vsel %vm1256, %v810, %v2098
      %v2128 = vsel %vm1256, %v811, %v2100
      %v2129 = vsel %vm1281, %v2127, %v2108
      %v2130 = vsel %vm1281, %v2128, %v2110
      %v2131 = vsel %vm1306, %v2129, %v2118
      %v2132 = vsel %vm1306, %v2130, %v2120
      %s2133 = scalar_lea.vmem %s5, 480
      %v2134 = vld [vmem:[%s2133] sm:$0xff]
      %v2135 = vld [vmem:[%s2133 + $0x8] sm:$0xff]
      %v2136 = vld [vmem:[%s2133 + $0x10] sm:$0xff]
      %v2137 = vld [vmem:[%s2133 + $0x18] sm:$0xff]
      %v2138 = vld [vmem:[%s2133 + $0x20] sm:$0xff]
      %v2139 = vld [vmem:[%s2133 + $0x28] sm:$0xff]
      %v2140 = vld [vmem:[%s2133 + $0x30] sm:$0xff]
      %v2141 = vld [vmem:[%s2133 + $0x38] sm:$0xff]
      %v2142 = vld [vmem:[%s2133 + $0x40] sm:$0xff]
      %v2143 = vld [vmem:[%s2133 + $0x48] sm:$0xff]
      %v2144 = vld [vmem:[%s2133 + $0x50] sm:$0xff]
      %v2145 = vld [vmem:[%s2133 + $0x58] sm:$0xff]
      %v2146 = vld [vmem:[%s2133 + $0x60] sm:$0xff]
      %v2147 = vld [vmem:[%s2133 + $0x68] sm:$0xff]
      %v2148 = vld [vmem:[%s2133 + $0x70] sm:$0xff]
      %v2149 = vld [vmem:[%s2133 + $0x78] sm:$0xff]
      %v2150 = vld [vmem:[%s2133 + $0x80] sm:$0xff]
      %v2151 = vld [vmem:[%s2133 + $0x88] sm:$0xff]
      %v2152 = vld [vmem:[%s2133 + $0x90] sm:$0xff]
      %v2153 = vld [vmem:[%s2133 + $0x98] sm:$0xff]
      %v2154 = vsel %vm1256, %v2124, 0
      %v2156 = vsel %vm1256, %v2126, 0
      %2158 = vmatpush.msra.mxu0 %v2149
      %2159 = vmatpush.msra.mxu0 %v2148
      %2160 = vmatpush.msra.mxu0 %v2147
      %2161 = vmatpush.msra.mxu0 %v2146
      %2162 = vmatpush.msra.mxu0 %v2145
      %2163 = vmatpush.msra.mxu0 %v2144
      %2164 = vmatpush.msra.mxu0 %v2143
      %2165 = vmatpush.msra.mxu0 %v2142
      %2166 = vmatpush.msra.mxu0 %v2141
      %2167 = vmatpush.msra.mxu0 %v2140
      %2168 = vmatpush.msra.mxu0 %v2139
      %2169 = vmatpush.msra.mxu0 %v2138
      %2170 = vmatpush.msra.mxu0 %v2137
      %2171 = vmatpush.msra.mxu0 %v2136
      %2172 = vmatpush.msra.mxu0 %v2135
      %2173 = vmatpush.msra.mxu0 %v2134
      %2174 = vmatmul.f32.gmra.mxu0 %v1313
      %v2175 = vpop.f32.mrf.mxu0
      %v2176 = vadd.f32 0.0, %v2175
      %2177 = vmatmul.f32.gmra.mxu0 %v1314
      %v2178 = vpop.f32.mrf.mxu0
      %v2179 = vadd.f32 0.0, %v2178
      %2180 = vmatmul.f32.gmra.mxu0 %v1315
      %v2181 = vpop.f32.mrf.mxu0
      %v2182 = vadd.f32 0.0, %v2181
      %2183 = vmatmul.f32.gmra.mxu0 %v1316
      %v2184 = vpop.f32.mrf.mxu0
      %v2185 = vadd.f32 0.0, %v2184
      %2186 = vmatmul.f32.gmra.mxu0 %v1317
      %v2187 = vpop.f32.mrf.mxu0
      %v2188 = vadd.f32 0.0, %v2187
      %2189 = vmatmul.f32.gmra.mxu0 %v1318
      %v2190 = vpop.f32.mrf.mxu0
      %v2191 = vadd.f32 0.0, %v2190
      %2192 = vmatmul.f32.gmra.mxu0 %v1319
      %v2193 = vpop.f32.mrf.mxu0
      %v2194 = vadd.f32 0.0, %v2193
      %2195 = vmatmul.f32.gmra.mxu0 %v1320
      %v2196 = vpop.f32.mrf.mxu0
      %v2197 = vadd.f32 0.0, %v2196
      %2198 = vmatmul.f32.gmra.mxu0 %v1321
      %v2199 = vpop.f32.mrf.mxu0
      %v2200 = vadd.f32 0.0, %v2199
      %2201 = vmatmul.f32.gmra.mxu0 %v1322
      %v2202 = vpop.f32.mrf.mxu0
      %v2203 = vadd.f32 0.0, %v2202
      %2204 = vmatmul.f32.gmra.mxu0 %v1323
      %v2205 = vpop.f32.mrf.mxu0
      %v2206 = vadd.f32 0.0, %v2205
      %2207 = vmatmul.f32.gmra.mxu0 %v1324
      %v2208 = vpop.f32.mrf.mxu0
      %v2209 = vadd.f32 0.0, %v2208
      %2210 = vmatmul.f32.gmra.mxu0 %v1325
      %v2211 = vpop.f32.mrf.mxu0
      %v2212 = vadd.f32 0.0, %v2211
      %2213 = vmatmul.f32.gmra.mxu0 %v1326
      %v2214 = vpop.f32.mrf.mxu0
      %v2215 = vadd.f32 0.0, %v2214
      %2216 = vmatmul.f32.gmra.mxu0 %v1327
      %v2217 = vpop.f32.mrf.mxu0
      %v2218 = vadd.f32 0.0, %v2217
      %2219 = vmatmul.f32.gmra.mxu0 %v1328
      %v2220 = vpop.f32.mrf.mxu0
      %v2221 = vadd.f32 0.0, %v2220
      %2222 = vmatmul.f32.gmra.mxu0 %v1329
      %v2223 = vpop.f32.mrf.mxu0
      %v2224 = vadd.f32 0.0, %v2223
      %2225 = vmatmul.f32.gmra.mxu0 %v1330
      %v2226 = vpop.f32.mrf.mxu0
      %v2227 = vadd.f32 0.0, %v2226
      %2228 = vmatmul.f32.gmra.mxu0 %v1391
      %v2229 = vpop.f32.mrf.mxu0
      %v2230 = vadd.f32 0.0, %v2229
      %2231 = vmatmul.f32.gmra.mxu0 %v1392
      %v2232 = vpop.f32.mrf.mxu0
      %v2233 = vadd.f32 0.0, %v2232
      %2234 = vmatmul.f32.gmra.mxu0 %v1862
      %v2235 = vpop.f32.mrf.mxu0
      %v2236 = vadd.f32 0.0, %v2235
      %2237 = vmatmul.f32.gmra.mxu0 %v1863
      %v2238 = vpop.f32.mrf.mxu0
      %v2239 = vadd.f32 0.0, %v2238
      %2240 = vmatmul.f32.gmra.mxu0 %v2131
      %v2241 = vpop.f32.mrf.mxu0
      %v2242 = vadd.f32 0.0, %v2241
      %2243 = vmatmul.f32.gmra.mxu0 %v2132
      %v2244 = vpop.f32.mrf.mxu0
      %v2245 = vadd.f32 0.0, %v2244
      %2246 = vdwg.mxu0
      %2247 = vmatpush.msra.mxu0 0.0
      %2248 = vmatpush.msra.mxu0 0.0
      %2249 = vmatpush.msra.mxu0 0.0
      %2250 = vmatpush.msra.mxu0 0.0
      %2251 = vmatpush.msra.mxu0 0.0
      %2252 = vmatpush.msra.mxu0 0.0
      %2253 = vmatpush.msra.mxu0 0.0
      %2254 = vmatpush.msra.mxu0 0.0
      %2255 = vmatpush.msra.mxu0 0.0
      %2256 = vmatpush.msra.mxu0 0.0
      %2257 = vmatpush.msra.mxu0 0.0
      %2258 = vmatpush.msra.mxu0 0.0
      %2259 = vmatpush.msra.mxu0 %v2153
      %2260 = vmatpush.msra.mxu0 %v2152
      %2261 = vmatpush.msra.mxu0 %v2151
      %2262 = vmatpush.msra.mxu0 %v2150
      %2263 = vmatmul.f32.gmra.mxu0 %v1422
      %v2264 = vpop.f32.mrf.mxu0
      %v2265 = vadd.f32 %v2176, %v2264
      %2266 = vmatmul.f32.gmra.mxu0 %v1424
      %v2267 = vpop.f32.mrf.mxu0
      %v2268 = vadd.f32 %v2179, %v2267
      %2269 = vmatmul.f32.gmra.mxu0 %v1426
      %v2270 = vpop.f32.mrf.mxu0
      %v2271 = vadd.f32 %v2182, %v2270
      %2272 = vmatmul.f32.gmra.mxu0 %v1428
      %v2273 = vpop.f32.mrf.mxu0
      %v2274 = vadd.f32 %v2185, %v2273
      %2275 = vmatmul.f32.gmra.mxu0 %v1430
      %v2276 = vpop.f32.mrf.mxu0
      %v2277 = vadd.f32 %v2188, %v2276
      %2278 = vmatmul.f32.gmra.mxu0 %v1432
      %v2279 = vpop.f32.mrf.mxu0
      %v2280 = vadd.f32 %v2191, %v2279
      %2281 = vmatmul.f32.gmra.mxu0 %v1434
      %v2282 = vpop.f32.mrf.mxu0
      %v2283 = vadd.f32 %v2194, %v2282
      %2284 = vmatmul.f32.gmra.mxu0 %v1436
      %v2285 = vpop.f32.mrf.mxu0
      %v2286 = vadd.f32 %v2197, %v2285
      %2287 = vmatmul.f32.gmra.mxu0 %v1438
      %v2288 = vpop.f32.mrf.mxu0
      %v2289 = vadd.f32 %v2200, %v2288
      %2290 = vmatmul.f32.gmra.mxu0 %v1440
      %v2291 = vpop.f32.mrf.mxu0
      %v2292 = vadd.f32 %v2203, %v2291
      %2293 = vmatmul.f32.gmra.mxu0 %v1442
      %v2294 = vpop.f32.mrf.mxu0
      %v2295 = vadd.f32 %v2206, %v2294
      %2296 = vmatmul.f32.gmra.mxu0 %v1444
      %v2297 = vpop.f32.mrf.mxu0
      %v2298 = vadd.f32 %v2209, %v2297
      %2299 = vmatmul.f32.gmra.mxu0 %v1446
      %v2300 = vpop.f32.mrf.mxu0
      %v2301 = vadd.f32 %v2212, %v2300
      %2302 = vmatmul.f32.gmra.mxu0 %v1448
      %v2303 = vpop.f32.mrf.mxu0
      %v2304 = vadd.f32 %v2215, %v2303
      %2305 = vmatmul.f32.gmra.mxu0 %v1450
      %v2306 = vpop.f32.mrf.mxu0
      %v2307 = vadd.f32 %v2218, %v2306
      %2308 = vmatmul.f32.gmra.mxu0 %v1452
      %v2309 = vpop.f32.mrf.mxu0
      %v2310 = vadd.f32 %v2221, %v2309
      %2311 = vmatmul.f32.gmra.mxu0 %v1454
      %v2312 = vpop.f32.mrf.mxu0
      %v2313 = vadd.f32 %v2224, %v2312
      %2314 = vmatmul.f32.gmra.mxu0 %v1456
      %v2315 = vpop.f32.mrf.mxu0
      %v2316 = vadd.f32 %v2227, %v2315
      %2317 = vmatmul.f32.gmra.mxu0 %v1458
      %v2318 = vpop.f32.mrf.mxu0
      %v2319 = vadd.f32 %v2230, %v2318
      %2320 = vmatmul.f32.gmra.mxu0 %v1460
      %v2321 = vpop.f32.mrf.mxu0
      %v2322 = vadd.f32 %v2233, %v2321
      %2323 = vmatmul.f32.gmra.mxu0 %v1885
      %v2324 = vpop.f32.mrf.mxu0
      %v2325 = vadd.f32 %v2236, %v2324
      %2326 = vmatmul.f32.gmra.mxu0 %v1887
      %v2327 = vpop.f32.mrf.mxu0
      %v2328 = vadd.f32 %v2239, %v2327
      %2329 = vmatmul.f32.gmra.mxu0 %v2154
      %v2330 = vpop.f32.mrf.mxu0
      %v2331 = vadd.f32 %v2242, %v2330
      %2332 = vmatmul.f32.gmra.mxu0 %v2156
      %v2333 = vpop.f32.mrf.mxu0
      %v2334 = vadd.f32 %v2245, %v2333
      %2335 = vdwg.mxu0
      %v2336 = vadd.f32 %v2067, %v2265
      %v2337 = vadd.f32 %v2068, %v2268
      %v2338 = vadd.f32 %v2069, %v2271
      %v2339 = vadd.f32 %v2070, %v2274
      %v2340 = vadd.f32 %v2071, %v2277
      %v2341 = vadd.f32 %v2072, %v2280
      %v2342 = vadd.f32 %v2073, %v2283
      %v2343 = vadd.f32 %v2074, %v2286
      %v2344 = vadd.f32 %v2075, %v2289
      %v2345 = vadd.f32 %v2076, %v2292
      %v2346 = vadd.f32 %v2077, %v2295
      %v2347 = vadd.f32 %v2078, %v2298
      %v2348 = vadd.f32 %v2079, %v2301
      %v2349 = vadd.f32 %v2080, %v2304
      %v2350 = vadd.f32 %v2081, %v2307
      %v2351 = vadd.f32 %v2082, %v2310
      %v2352 = vadd.f32 %v2083, %v2313
      %v2353 = vadd.f32 %v2084, %v2316
      %v2354 = vadd.f32 %v2085, %v2319
      %v2355 = vadd.f32 %v2086, %v2322
      %v2356 = vadd.f32 %v2087, %v2325
      %v2357 = vadd.f32 %v2088, %v2328
      %v2358 = vadd.f32 %v2089, %v2331
      %v2359 = vadd.f32 %v2090, %v2334
      %v2362 = vrot.slane %v813, 1
      %v2363 = vsel %vm840, %v2095, %v2362
      %v2364 = vrot.slane %v814, 1
      %v2365 = vsel %vm840, %v2362, %v2364
      %2366 = vrot.lane.b32.xlu0 %v2363, 32
      %v2367 = vpop.permute.xlu0 %2366
      %2368 = vrot.lane.b32.xlu0 %v2365, 32
      %v2369 = vpop.permute.xlu0 %2368
      %v2372 = vrot.slane %v813, 2
      %v2373 = vsel %vm962, %v2105, %v2372
      %v2374 = vrot.slane %v814, 2
      %v2375 = vsel %vm962, %v2372, %v2374
      %2376 = vrot.lane.b32.xlu0 %v2373, 64
      %v2377 = vpop.permute.xlu0 %2376
      %2378 = vrot.lane.b32.xlu0 %v2375, 64
      %v2379 = vpop.permute.xlu0 %2378
      %v2382 = vrot.slane %v813, 3
      %v2383 = vsel %vm1084, %v2115, %v2382
      %v2384 = vrot.slane %v814, 3
      %v2385 = vsel %vm1084, %v2382, %v2384
      %2386 = vrot.lane.b32.xlu0 %v2383, 96
      %v2387 = vpop.permute.xlu0 %2386
      %2388 = vrot.lane.b32.xlu0 %v2385, 96
      %v2389 = vpop.permute.xlu0 %2388
      %v2392 = vrot.slane %v813, 4
      %v2393 = vsel %vm1206, %v2125, %v2392
      %v2394 = vrot.slane %v814, 4
      %v2395 = vsel %vm1206, %v2392, %v2394
      %v2396 = vsel %vm1256, %v812, %v2367
      %v2397 = vsel %vm1256, %v813, %v2369
      %v2398 = vsel %vm1281, %v2396, %v2377
      %v2399 = vsel %vm1281, %v2397, %v2379
      %v2400 = vsel %vm1306, %v2398, %v2387
      %v2401 = vsel %vm1306, %v2399, %v2389
      %s2402 = scalar_lea.vmem %s5, 640
      %v2403 = vld [vmem:[%s2402] sm:$0xff]
      %v2404 = vld [vmem:[%s2402 + $0x8] sm:$0xff]
      %v2405 = vld [vmem:[%s2402 + $0x10] sm:$0xff]
      %v2406 = vld [vmem:[%s2402 + $0x18] sm:$0xff]
      %v2407 = vld [vmem:[%s2402 + $0x20] sm:$0xff]
      %v2408 = vld [vmem:[%s2402 + $0x28] sm:$0xff]
      %v2409 = vld [vmem:[%s2402 + $0x30] sm:$0xff]
      %v2410 = vld [vmem:[%s2402 + $0x38] sm:$0xff]
      %v2411 = vld [vmem:[%s2402 + $0x40] sm:$0xff]
      %v2412 = vld [vmem:[%s2402 + $0x48] sm:$0xff]
      %v2413 = vld [vmem:[%s2402 + $0x50] sm:$0xff]
      %v2414 = vld [vmem:[%s2402 + $0x58] sm:$0xff]
      %v2415 = vld [vmem:[%s2402 + $0x60] sm:$0xff]
      %v2416 = vld [vmem:[%s2402 + $0x68] sm:$0xff]
      %v2417 = vld [vmem:[%s2402 + $0x70] sm:$0xff]
      %v2418 = vld [vmem:[%s2402 + $0x78] sm:$0xff]
      %v2419 = vld [vmem:[%s2402 + $0x80] sm:$0xff]
      %v2420 = vld [vmem:[%s2402 + $0x88] sm:$0xff]
      %v2421 = vld [vmem:[%s2402 + $0x90] sm:$0xff]
      %v2422 = vld [vmem:[%s2402 + $0x98] sm:$0xff]
      %v2423 = vsel %vm1256, %v2393, 0
      %v2425 = vsel %vm1256, %v2395, 0
      %2427 = vmatpush.msra.mxu0 %v2418
      %2428 = vmatpush.msra.mxu0 %v2417
      %2429 = vmatpush.msra.mxu0 %v2416
      %2430 = vmatpush.msra.mxu0 %v2415
      %2431 = vmatpush.msra.mxu0 %v2414
      %2432 = vmatpush.msra.mxu0 %v2413
      %2433 = vmatpush.msra.mxu0 %v2412
      %2434 = vmatpush.msra.mxu0 %v2411
      %2435 = vmatpush.msra.mxu0 %v2410
      %2436 = vmatpush.msra.mxu0 %v2409
      %2437 = vmatpush.msra.mxu0 %v2408
      %2438 = vmatpush.msra.mxu0 %v2407
      %2439 = vmatpush.msra.mxu0 %v2406
      %2440 = vmatpush.msra.mxu0 %v2405
      %2441 = vmatpush.msra.mxu0 %v2404
      %2442 = vmatpush.msra.mxu0 %v2403
      %2443 = vmatmul.f32.gmra.mxu0 %v1315
      %v2444 = vpop.f32.mrf.mxu0
      %v2445 = vadd.f32 0.0, %v2444
      %2446 = vmatmul.f32.gmra.mxu0 %v1316
      %v2447 = vpop.f32.mrf.mxu0
      %v2448 = vadd.f32 0.0, %v2447
      %2449 = vmatmul.f32.gmra.mxu0 %v1317
      %v2450 = vpop.f32.mrf.mxu0
      %v2451 = vadd.f32 0.0, %v2450
      %2452 = vmatmul.f32.gmra.mxu0 %v1318
      %v2453 = vpop.f32.mrf.mxu0
      %v2454 = vadd.f32 0.0, %v2453
      %2455 = vmatmul.f32.gmra.mxu0 %v1319
      %v2456 = vpop.f32.mrf.mxu0
      %v2457 = vadd.f32 0.0, %v2456
      %2458 = vmatmul.f32.gmra.mxu0 %v1320
      %v2459 = vpop.f32.mrf.mxu0
      %v2460 = vadd.f32 0.0, %v2459
      %2461 = vmatmul.f32.gmra.mxu0 %v1321
      %v2462 = vpop.f32.mrf.mxu0
      %v2463 = vadd.f32 0.0, %v2462
      %2464 = vmatmul.f32.gmra.mxu0 %v1322
      %v2465 = vpop.f32.mrf.mxu0
      %v2466 = vadd.f32 0.0, %v2465
      %2467 = vmatmul.f32.gmra.mxu0 %v1323
      %v2468 = vpop.f32.mrf.mxu0
      %v2469 = vadd.f32 0.0, %v2468
      %2470 = vmatmul.f32.gmra.mxu0 %v1324
      %v2471 = vpop.f32.mrf.mxu0
      %v2472 = vadd.f32 0.0, %v2471
      %2473 = vmatmul.f32.gmra.mxu0 %v1325
      %v2474 = vpop.f32.mrf.mxu0
      %v2475 = vadd.f32 0.0, %v2474
      %2476 = vmatmul.f32.gmra.mxu0 %v1326
      %v2477 = vpop.f32.mrf.mxu0
      %v2478 = vadd.f32 0.0, %v2477
      %2479 = vmatmul.f32.gmra.mxu0 %v1327
      %v2480 = vpop.f32.mrf.mxu0
      %v2481 = vadd.f32 0.0, %v2480
      %2482 = vmatmul.f32.gmra.mxu0 %v1328
      %v2483 = vpop.f32.mrf.mxu0
      %v2484 = vadd.f32 0.0, %v2483
      %2485 = vmatmul.f32.gmra.mxu0 %v1329
      %v2486 = vpop.f32.mrf.mxu0
      %v2487 = vadd.f32 0.0, %v2486
      %2488 = vmatmul.f32.gmra.mxu0 %v1330
      %v2489 = vpop.f32.mrf.mxu0
      %v2490 = vadd.f32 0.0, %v2489
      %2491 = vmatmul.f32.gmra.mxu0 %v1391
      %v2492 = vpop.f32.mrf.mxu0
      %v2493 = vadd.f32 0.0, %v2492
      %2494 = vmatmul.f32.gmra.mxu0 %v1392
      %v2495 = vpop.f32.mrf.mxu0
      %v2496 = vadd.f32 0.0, %v2495
      %2497 = vmatmul.f32.gmra.mxu0 %v1862
      %v2498 = vpop.f32.mrf.mxu0
      %v2499 = vadd.f32 0.0, %v2498
      %2500 = vmatmul.f32.gmra.mxu0 %v1863
      %v2501 = vpop.f32.mrf.mxu0
      %v2502 = vadd.f32 0.0, %v2501
      %2503 = vmatmul.f32.gmra.mxu0 %v2131
      %v2504 = vpop.f32.mrf.mxu0
      %v2505 = vadd.f32 0.0, %v2504
      %2506 = vmatmul.f32.gmra.mxu0 %v2132
      %v2507 = vpop.f32.mrf.mxu0
      %v2508 = vadd.f32 0.0, %v2507
      %2509 = vmatmul.f32.gmra.mxu0 %v2400
      %v2510 = vpop.f32.mrf.mxu0
      %v2511 = vadd.f32 0.0, %v2510
      %2512 = vmatmul.f32.gmra.mxu0 %v2401
      %v2513 = vpop.f32.mrf.mxu0
      %v2514 = vadd.f32 0.0, %v2513
      %2515 = vdwg.mxu0
      %2516 = vmatpush.msra.mxu0 0.0
      %2517 = vmatpush.msra.mxu0 0.0
      %2518 = vmatpush.msra.mxu0 0.0
      %2519 = vmatpush.msra.mxu0 0.0
      %2520 = vmatpush.msra.mxu0 0.0
      %2521 = vmatpush.msra.mxu0 0.0
      %2522 = vmatpush.msra.mxu0 0.0
      %2523 = vmatpush.msra.mxu0 0.0
      %2524 = vmatpush.msra.mxu0 0.0
      %2525 = vmatpush.msra.mxu0 0.0
      %2526 = vmatpush.msra.mxu0 0.0
      %2527 = vmatpush.msra.mxu0 0.0
      %2528 = vmatpush.msra.mxu0 %v2422
      %2529 = vmatpush.msra.mxu0 %v2421
      %2530 = vmatpush.msra.mxu0 %v2420
      %2531 = vmatpush.msra.mxu0 %v2419
      %2532 = vmatmul.f32.gmra.mxu0 %v1426
      %v2533 = vpop.f32.mrf.mxu0
      %v2534 = vadd.f32 %v2445, %v2533
      %2535 = vmatmul.f32.gmra.mxu0 %v1428
      %v2536 = vpop.f32.mrf.mxu0
      %v2537 = vadd.f32 %v2448, %v2536
      %2538 = vmatmul.f32.gmra.mxu0 %v1430
      %v2539 = vpop.f32.mrf.mxu0
      %v2540 = vadd.f32 %v2451, %v2539
      %2541 = vmatmul.f32.gmra.mxu0 %v1432
      %v2542 = vpop.f32.mrf.mxu0
      %v2543 = vadd.f32 %v2454, %v2542
      %2544 = vmatmul.f32.gmra.mxu0 %v1434
      %v2545 = vpop.f32.mrf.mxu0
      %v2546 = vadd.f32 %v2457, %v2545
      %2547 = vmatmul.f32.gmra.mxu0 %v1436
      %v2548 = vpop.f32.mrf.mxu0
      %v2549 = vadd.f32 %v2460, %v2548
      %2550 = vmatmul.f32.gmra.mxu0 %v1438
      %v2551 = vpop.f32.mrf.mxu0
      %v2552 = vadd.f32 %v2463, %v2551
      %2553 = vmatmul.f32.gmra.mxu0 %v1440
      %v2554 = vpop.f32.mrf.mxu0
      %v2555 = vadd.f32 %v2466, %v2554
      %2556 = vmatmul.f32.gmra.mxu0 %v1442
      %v2557 = vpop.f32.mrf.mxu0
      %v2558 = vadd.f32 %v2469, %v2557
      %2559 = vmatmul.f32.gmra.mxu0 %v1444
      %v2560 = vpop.f32.mrf.mxu0
      %v2561 = vadd.f32 %v2472, %v2560
      %2562 = vmatmul.f32.gmra.mxu0 %v1446
      %v2563 = vpop.f32.mrf.mxu0
      %v2564 = vadd.f32 %v2475, %v2563
      %2565 = vmatmul.f32.gmra.mxu0 %v1448
      %v2566 = vpop.f32.mrf.mxu0
      %v2567 = vadd.f32 %v2478, %v2566
      %2568 = vmatmul.f32.gmra.mxu0 %v1450
      %v2569 = vpop.f32.mrf.mxu0
      %v2570 = vadd.f32 %v2481, %v2569
      %2571 = vmatmul.f32.gmra.mxu0 %v1452
      %v2572 = vpop.f32.mrf.mxu0
      %v2573 = vadd.f32 %v2484, %v2572
      %2574 = vmatmul.f32.gmra.mxu0 %v1454
      %v2575 = vpop.f32.mrf.mxu0
      %v2576 = vadd.f32 %v2487, %v2575
      %2577 = vmatmul.f32.gmra.mxu0 %v1456
      %v2578 = vpop.f32.mrf.mxu0
      %v2579 = vadd.f32 %v2490, %v2578
      %2580 = vmatmul.f32.gmra.mxu0 %v1458
      %v2581 = vpop.f32.mrf.mxu0
      %v2582 = vadd.f32 %v2493, %v2581
      %2583 = vmatmul.f32.gmra.mxu0 %v1460
      %v2584 = vpop.f32.mrf.mxu0
      %v2585 = vadd.f32 %v2496, %v2584
      %2586 = vmatmul.f32.gmra.mxu0 %v1885
      %v2587 = vpop.f32.mrf.mxu0
      %v2588 = vadd.f32 %v2499, %v2587
      %2589 = vmatmul.f32.gmra.mxu0 %v1887
      %v2590 = vpop.f32.mrf.mxu0
      %v2591 = vadd.f32 %v2502, %v2590
      %2592 = vmatmul.f32.gmra.mxu0 %v2154
      %v2593 = vpop.f32.mrf.mxu0
      %v2594 = vadd.f32 %v2505, %v2593
      %2595 = vmatmul.f32.gmra.mxu0 %v2156
      %v2596 = vpop.f32.mrf.mxu0
      %v2597 = vadd.f32 %v2508, %v2596
      %2598 = vmatmul.f32.gmra.mxu0 %v2423
      %v2599 = vpop.f32.mrf.mxu0
      %v2600 = vadd.f32 %v2511, %v2599
      %2601 = vmatmul.f32.gmra.mxu0 %v2425
      %v2602 = vpop.f32.mrf.mxu0
      %v2603 = vadd.f32 %v2514, %v2602
      %2604 = vdwg.mxu0
      %v2605 = vadd.f32 %v2336, %v2534
      %v2606 = vadd.f32 %v2337, %v2537
      %v2607 = vadd.f32 %v2338, %v2540
      %v2608 = vadd.f32 %v2339, %v2543
      %v2609 = vadd.f32 %v2340, %v2546
      %v2610 = vadd.f32 %v2341, %v2549
      %v2611 = vadd.f32 %v2342, %v2552
      %v2612 = vadd.f32 %v2343, %v2555
      %v2613 = vadd.f32 %v2344, %v2558
      %v2614 = vadd.f32 %v2345, %v2561
      %v2615 = vadd.f32 %v2346, %v2564
      %v2616 = vadd.f32 %v2347, %v2567
      %v2617 = vadd.f32 %v2348, %v2570
      %v2618 = vadd.f32 %v2349, %v2573
      %v2619 = vadd.f32 %v2350, %v2576
      %v2620 = vadd.f32 %v2351, %v2579
      %v2621 = vadd.f32 %v2352, %v2582
      %v2622 = vadd.f32 %v2353, %v2585
      %v2623 = vadd.f32 %v2354, %v2588
      %v2624 = vadd.f32 %v2355, %v2591
      %v2625 = vadd.f32 %v2356, %v2594
      %v2626 = vadd.f32 %v2357, %v2597
      %v2627 = vadd.f32 %v2358, %v2600
      %v2628 = vadd.f32 %v2359, %v2603
      %v2629 = vld [vmem:[%s6] sm:$0x1]
      %v2631 = vperm.slane %v2629, 0
      %v2633 = vadd.f32 %v2605, %v2631
      %v2634 = vadd.f32 %v2606, %v2631
      %v2635 = vadd.f32 %v2607, %v2631
      %v2636 = vadd.f32 %v2608, %v2631
      %v2637 = vadd.f32 %v2609, %v2631
      %v2638 = vadd.f32 %v2610, %v2631
      %v2639 = vadd.f32 %v2611, %v2631
      %v2640 = vadd.f32 %v2612, %v2631
      %v2641 = vadd.f32 %v2613, %v2631
      %v2642 = vadd.f32 %v2614, %v2631
      %v2643 = vadd.f32 %v2615, %v2631
      %v2644 = vadd.f32 %v2616, %v2631
      %v2645 = vadd.f32 %v2617, %v2631
      %v2646 = vadd.f32 %v2618, %v2631
      %v2647 = vadd.f32 %v2619, %v2631
      %v2648 = vadd.f32 %v2620, %v2631
      %v2649 = vadd.f32 %v2621, %v2631
      %v2650 = vadd.f32 %v2622, %v2631
      %v2651 = vadd.f32 %v2623, %v2631
      %v2652 = vadd.f32 %v2624, %v2631
      %v2653 = vadd.f32 %v2625, %v2631
      %v2654 = vadd.f32 %v2626, %v2631
      %v2655 = vadd.f32 %v2627, %v2631
      %v2656 = vadd.f32 %v2628, %v2631
      %2657 = vxpose.xlu0.b32.start [1/16] %v2633, 128
      %2658 = vxpose.xlu0.b32.cont [2/16] %v2634, 128
      %2659 = vxpose.xlu0.b32.cont [3/16] %v2635, 128
      %2660 = vxpose.xlu0.b32.cont [4/16] %v2636, 128
      %2661 = vxpose.xlu0.b32.cont [5/16] %v2637, 128
      %2662 = vxpose.xlu0.b32.cont [6/16] %v2638, 128
      %2663 = vxpose.xlu0.b32.cont [7/16] %v2639, 128
      %2664 = vxpose.xlu0.b32.cont [8/16] %v2640, 128
      %2665 = vxpose.xlu0.b32.cont [9/16] %v2641, 128
      %2666 = vxpose.xlu0.b32.cont [10/16] %v2642, 128
      %2667 = vxpose.xlu0.b32.cont [11/16] %v2643, 128
      %2668 = vxpose.xlu0.b32.cont [12/16] %v2644, 128
      %2669 = vxpose.xlu0.b32.cont [13/16] %v2645, 128
      %2670 = vxpose.xlu0.b32.cont [14/16] %v2646, 128
      %2671 = vxpose.xlu0.b32.cont [15/16] %v2647, 128
      %2672 = vxpose.xlu0.b32.end [16/16] %v2648, 128
      %v2673 = vpop.trf.xlu0
      %v2674 = vpop.trf.xlu0
      %v2675 = vpop.trf.xlu0
      %v2676 = vpop.trf.xlu0
      %v2677 = vpop.trf.xlu0
      %v2678 = vpop.trf.xlu0
      %v2679 = vpop.trf.xlu0
      %v2680 = vpop.trf.xlu0
      %v2681 = vpop.trf.xlu0
      %v2682 = vpop.trf.xlu0
      %v2683 = vpop.trf.xlu0
      %v2684 = vpop.trf.xlu0
      %v2685 = vpop.trf.xlu0
      %v2686 = vpop.trf.xlu0
      %v2687 = vpop.trf.xlu0
      %v2688 = vpop.trf.xlu0
      %2689 = vxpose.xlu0.b32.start [1/16] %v2649, 128
      %2690 = vxpose.xlu0.b32.cont [2/16] %v2650, 128
      %2691 = vxpose.xlu0.b32.cont [3/16] %v2651, 128
      %2692 = vxpose.xlu0.b32.cont [4/16] %v2652, 128
      %2693 = vxpose.xlu0.b32.cont [5/16] %v2653, 128
      %2694 = vxpose.xlu0.b32.cont [6/16] %v2654, 128
      %2695 = vxpose.xlu0.b32.cont [7/16] %v2655, 128
      %2696 = vxpose.xlu0.b32.cont [8/16] %v2656, 128
      %2697 = vxpose.xlu0.b32.cont [9/16] 0.0, 128
      %2698 = vxpose.xlu0.b32.cont [10/16] 0.0, 128
      %2699 = vxpose.xlu0.b32.cont [11/16] 0.0, 128
      %2700 = vxpose.xlu0.b32.cont [12/16] 0.0, 128
      %2701 = vxpose.xlu0.b32.cont [13/16] 0.0, 128
      %2702 = vxpose.xlu0.b32.cont [14/16] 0.0, 128
      %2703 = vxpose.xlu0.b32.cont [15/16] 0.0, 128
      %2704 = vxpose.xlu0.b32.end [16/16] 0.0, 128
      %v2705 = vpop.trf.xlu0
      %v2706 = vpop.trf.xlu0
      %v2707 = vpop.trf.xlu0
      %v2708 = vpop.trf.xlu0
      %v2709 = vpop.trf.xlu0
      %v2710 = vpop.trf.xlu0
      %v2711 = vpop.trf.xlu0
      %v2712 = vpop.trf.xlu0
      %v2713 = vpop.trf.xlu0
      %v2714 = vpop.trf.xlu0
      %v2715 = vpop.trf.xlu0
      %v2716 = vpop.trf.xlu0
      %v2717 = vpop.trf.xlu0
      %v2718 = vpop.trf.xlu0
      %v2719 = vpop.trf.xlu0
      %v2720 = vpop.trf.xlu0
      %2721 = vst [vmem:[%s278] sm:$0xff] %v2673
      %2722 = vst.msk [vmem:[%s278 + $0x8] sm:$0xff] %vm1281, %v2705
      %p2723 = scmp.lt.s32.totalorder %s18, 1
      %s2724 = scalar_select %p2723, %s18, 1
      %s2725 = smul.addr %s2724, 2
      %s2726 = smul.addr %s2725, 8
      %s2727 = scalar_lea.vmem %s7, %s2726
      // Predicated region
      $region49: #{network_forward.1} parent=47 // pred_check
        %p2728 = pneg %p188
      $region50: #{network_forward.1} parent=47 // pred_check_branch
        %2730 = sbr.rel (%p2728) target = $region52
      $region51: #{network_forward.1} parent=47 // pred_region
        _
      $region52: #{network_forward.1} parent=47 // pred_fallthru
        _
    $region48: #{network_forward.1} parent=5 // pred_fallthru
      _
    %p2731 = scmp.le.s32.totalorder 2, %s13
    // Predicated region
    $region53: #{network_forward.1} parent=5 // pred_check
      %p2732 = pneg %p2731
    $region54: #{network_forward.1} parent=5 // pred_check_branch
      %2734 = sbr.rel (%p2732) target = $region56
    $region55: #{network_forward.1} parent=5 // pred_region
      %s2735 = ssub.s32 %s13, 2
      // Predicated region
      $region57: #{network_forward.1} parent=55 // pred_check
        %p2736 = pneg %p194
      $region58: #{network_forward.1} parent=55 // pred_check_branch
        %2738 = sbr.rel (%p2736) target = $region60
      $region59: #{network_forward.1} parent=55 // pred_region
        %p2739 = scmp.lt.s32.totalorder %s19, 1
        %s2740 = scalar_select %p2739, %s19, 1
        %s2741 = smul.addr %s2740, 2
        %s2742 = smul.addr %s2741, 8
        %s2743 = scalar_lea.vmem %s7, %s2742
      $region60: #{network_forward.1} parent=55 // pred_fallthru
        _
    $region56: #{network_forward.1} parent=5 // pred_fallthru
      _
  $region6: #{network_forward.1} parent=0 // loop_footer
    %s17 = sadd.s32 1, %s13
  $region7: #{network_forward.1} parent=0 // loop_footer_branch
    %12 = sbr.rel target = $region3
  $region8: #{network_forward.1} parent=0 // loop_exit
    _

</llo_original>
